<compile_context>
chip_gen: v7x
topology: tpu7x:2x2x1
jax: 0.10.0
libtpu: 0.0.40
codegen_flags: <defaults>
</compile_context>

<pallas_src>
import functools

import jax
import jax.numpy as jnp
import numpy as np
from jax.experimental import pallas as pl
from jax.experimental.pallas import tpu as pltpu


# ----------------------------- Pallas kernel ------------------------------ #
def _pred_kernel(stride, reg_max, fmp_w, tile_m, num_classes,
                 cls_ref, reg_ref,
                 w_cls_ref, b_cls_ref,
                 w_ro_ref, b_ro_ref,
                 ps_ref,
                 obj_out_ref, cls_out_ref, reg_out_ref, box_out_ref):
    """One (batch, M-tile) block.

    Inputs (channel-major, free reshape of NCHW):
      cls_ref : (Ccls, TM)        reg_ref : (Creg, TM)
      w_cls   : (nc, Ccls)        b_cls   : (nc, 1)
      w_ro    : (4K+1, Creg)      b_ro    : (4K+1, 1)   rows [0,4K)=reg, row 4K=obj
      ps      : (8, 4K)  rows 0-3: +-proj block-diag (box sign folded in),
                         rows 4-7: block-diag ones (softmax denominators)
    Outputs (torch layout, written via in-kernel transpose):
      obj (1, TM) channel-major, cls (TM, nc), reg (TM, 4K), box (TM, 4)
    """
    k4 = 4 * reg_max
    x_cls = cls_ref[...]
    x_reg = reg_ref[...]

    # Fused reg+obj 1x1 conv: one MXU pass instead of two.
    ro = jnp.dot(w_ro_ref[...], x_reg,
                 preferred_element_type=jnp.float32) + b_ro_ref[...]        # (4K+1, TM)
    cls_cm = jnp.dot(w_cls_ref[...], x_cls,
                     preferred_element_type=jnp.float32) + b_cls_ref[...]   # (nc, TM)

    reg_cm = ro[0:k4, :]                     # raw DFL logits (4K, TM)
    obj_out_ref[...] = ro[k4:k4 + 1, :]      # (1, TM) lane-dense store

    # ---- DFL: per-16-bin-segment softmax (matches torch numerics, no NaN risk)
    #      followed by projection + box sign as one segmented matmul ----
    segs = []
    for c in range(4):                                        # static, unrolled
        s = reg_cm[c * reg_max:(c + 1) * reg_max, :]          # (K, TM)
        segs.append(jnp.exp(s - jnp.max(s, axis=0, keepdims=True)))
    e = jnp.concatenate(segs, axis=0)                         # (4K, TM)
    ps = jnp.dot(ps_ref[...], e, preferred_element_type=jnp.float32)  # (8, TM)
    dist = ps[0:4, :] / ps[4:8, :]           # signed distances: [-l, -t, +r, +b]

    # ---- anchors generated in-kernel (no anchor input DMA), channel-major ----
    t = pl.program_id(1)
    lane = jax.lax.broadcasted_iota(jnp.int32, (1, tile_m), 1)
    m_idx = (lane + t * tile_m).astype(jnp.float32)   # global pixel index (exact in f32)
    ay_i = jnp.floor(m_idx / float(fmp_w))            # row index
    ax_i = m_idx - ay_i * float(fmp_w)                # col index
    ax = (ax_i + 0.5) * stride
    ay = (ay_i + 0.5) * stride
    anc4 = jnp.concatenate([ax, ay, ax, ay], axis=0)  # (4, TM) rows [x, y, x, y]
    box_cm = anc4 + dist * stride                     # rows [x1, y1, x2, y2]

    # ---- in-kernel transposes -> (M, C) output layout (XLU is otherwise idle;
    #      avoids a full post-kernel XLA transpose pass over the outputs) ----
    reg_out_ref[...] = jnp.transpose(reg_cm, (1, 0))               # (TM, 4K)

    cls_pad = (-num_classes) % 8                                   # pad rows to 8-mult
    cls_src = cls_cm
    if cls_pad:
        cls_src = jnp.concatenate(
            [cls_cm, jnp.zeros((cls_pad, tile_m), cls_cm.dtype)], axis=0)
    cls_out_ref[...] = jnp.transpose(cls_src, (1, 0))[:, 0:num_classes]

    box_src = jnp.concatenate(
        [box_cm, jnp.zeros((4, tile_m), box_cm.dtype)], axis=0)    # (8, TM)
    box_out_ref[...] = jnp.transpose(box_src, (1, 0))[:, 0:4]


def _round_up(x, m):
    return (x + m - 1) // m * m


def _pick_tile_m(m_padded, batch, cap=4096):
    """Largest multiple-of-128 divisor of m_padded (<= cap) with >=2 total grid steps."""
    cands = [d for d in range(128, min(m_padded, cap) + 1, 128) if m_padded % d == 0]
    if not cands:
        return m_padded
    for d in sorted(cands, reverse=True):
        if batch * (m_padded // d) >= 2:      # keep pipeline / v7x megacore busy
            return d
    return max(cands)


def single_level_pred(cls_cm, reg_cm, w_cls, b_cls, w_ro, b_ro, ps_mat,
                      stride, fmp_w, num_classes, reg_max):
    """cls_cm/reg_cm: (B, C, M_pad) channel-major feature maps (M_pad % 128 == 0)."""
    B, Ccls, Mp = cls_cm.shape
    Creg = reg_cm.shape[1]
    k4 = 4 * reg_max
    TM = _pick_tile_m(Mp, B)
    n_t = Mp // TM

    kernel = functools.partial(_pred_kernel, float(stride), int(reg_max),
                               int(fmp_w), int(TM), int(num_classes))

    out_shape = (
        jax.ShapeDtypeStruct((B, 1, Mp), jnp.float32),            # obj (channel-major)
        jax.ShapeDtypeStruct((B, Mp, num_classes), jnp.float32),  # cls (B, M, nc)
        jax.ShapeDtypeStruct((B, Mp, k4), jnp.float32),           # reg logits (B, M, 4K)
        jax.ShapeDtypeStruct((B, Mp, 4), jnp.float32),            # decoded box (B, M, 4)
    )

    def feat_spec(C):
        # NOTE: add pipeline_mode=pl.Buffered(3) here if xprof shows exposed DMA
        # on v5e; prefer the larger TM (already applied) first.
        return pl.BlockSpec((None, C, TM), lambda b, t: (b, 0, t))

    def const_spec(r, c):
        return pl.BlockSpec((r, c), lambda b, t: (0, 0))  # stays VMEM-resident

    grid_spec = pltpu.PrefetchScalarGridSpec(
        num_scalar_prefetch=0,
        grid=(B, n_t),
        in_specs=[
            feat_spec(Ccls),                  # cls_feat
            feat_spec(Creg),                  # reg_feat
            const_spec(num_classes, Ccls),    # w_cls
            const_spec(num_classes, 1),       # b_cls
            const_spec(k4 + 1, Creg),         # fused w_reg|w_obj
            const_spec(k4 + 1, 1),            # fused b_reg|b_obj
            const_spec(8, k4),                # DFL proj/denominator matrix
        ],
        out_specs=[
            pl.BlockSpec((None, 1, TM), lambda b, t: (b, 0, t)),
            pl.BlockSpec((None, TM, num_classes), lambda b, t: (b, t, 0)),
            pl.BlockSpec((None, TM, k4), lambda b, t: (b, t, 0)),
            pl.BlockSpec((None, TM, 4), lambda b, t: (b, t, 0)),
        ],
    )

    return pl.pallas_call(
        kernel,
        out_shape=out_shape,
        grid_spec=grid_spec,
        compiler_params=pltpu.CompilerParams(
            dimension_semantics=("parallel", "parallel")),
    )(cls_cm, reg_cm, w_cls, b_cls, w_ro, b_ro, ps_mat)


# ----------------------------- module wrapper ------------------------------ #
class MultiLevelPredLayerPallas:
    def __init__(self, cls_dim, reg_dim, strides, num_classes, num_coords=4,
                 num_levels=3, reg_max=16, key=None, feature_dtype=jnp.float32):
        self.cls_dim = cls_dim
        self.reg_dim = reg_dim
        self.strides = strides
        self.num_classes = num_classes
        self.num_coords = num_coords
        self.num_levels = num_levels
        self.reg_max = reg_max
        self.feature_dtype = feature_dtype   # set bf16 on v5e (re-check tolerances)

        if key is None:
            key = jax.random.PRNGKey(0)

        # bias init exactly as SingleLevelPredLayer.init_bias
        init_prob = 0.01
        bias_value = -float(np.log((1.0 - init_prob) / init_prob))
        k4 = num_coords * reg_max

        self.level_params = []
        for _ in range(num_levels):
            key, k1, k2 = jax.random.split(key, 3)
            # channel-major weights: (Cout, Cin)
            w_obj = 0.1 * jax.random.normal(k1, (1, reg_dim), jnp.float32)
            b_obj = jnp.full((1, 1), bias_value, jnp.float32)
            w_cls = 0.1 * jax.random.normal(k2, (num_classes, cls_dim), jnp.float32)
            b_cls = jnp.full((num_classes, 1), bias_value, jnp.float32)
            w_reg = jnp.zeros((k4, reg_dim), jnp.float32)   # init_bias: weight = 0
            b_reg = jnp.ones((k4, 1), jnp.float32)          # init_bias: bias = 1
            # fused reg|obj head (reg rows first so the 4K slice stays aligned)
            w_ro = jnp.concatenate([w_reg, w_obj], axis=0)
            b_ro = jnp.concatenate([b_reg, b_obj], axis=0)
            self.level_params.append((w_cls, b_cls, w_ro, b_ro))

        # proj exactly as the torch module: linspace(0, reg_max, reg_max)
        self.proj = jnp.linspace(0.0, float(reg_max), reg_max, dtype=jnp.float32)

        # (8, 4K) DFL matrix: rows 0-3 = +-proj block-diagonal (box-decode sign
        # folded in), rows 4-7 = block-diagonal ones (softmax denominators).
        ps = np.zeros((8, k4), np.float32)
        proj_np = np.asarray(self.proj)
        sign = np.array([-1.0, -1.0, 1.0, 1.0], np.float32)
        for c in range(4):
            ps[c, c * reg_max:(c + 1) * reg_max] = sign[c] * proj_np
            ps[4 + c, c * reg_max:(c + 1) * reg_max] = 1.0
        self.ps_mat = jnp.asarray(ps)

    @staticmethod
    def generate_anchors(stride, fmp_size):
        H, W = fmp_size
        ay, ax = jnp.meshgrid(jnp.arange(H), jnp.arange(W), indexing="ij")
        anchors = jnp.stack([ax, ay], axis=-1).astype(jnp.float32).reshape(-1, 2)
        anchors = (anchors + 0.5) * float(stride)
        return anchors

    def __call__(self, cls_feats, reg_feats):
        """cls_feats/reg_feats: lists of NCHW arrays, one per level."""
        all_anchors, all_stride_t = [], []
        all_obj, all_cls, all_reg, all_box = [], [], [], []

        for level in range(self.num_levels):
            cls_nchw = cls_feats[level]
            reg_nchw = reg_feats[level]
            B, _, H, W = cls_nchw.shape
            M = H * W
            stride = self.strides[level]

            # channel-major (B, C, M): a free reshape of NCHW (no transpose pass)
            cls_cm = cls_nchw.reshape(B, self.cls_dim, M)
            reg_cm = reg_nchw.reshape(B, self.reg_dim, M)
            w_cls, b_cls, w_ro, b_ro = self.level_params[level]
            if self.feature_dtype != jnp.float32:
                cls_cm = cls_cm.astype(self.feature_dtype)
                reg_cm = reg_cm.astype(self.feature_dtype)
                w_cls = w_cls.astype(self.feature_dtype)
                w_ro = w_ro.astype(self.feature_dtype)

            # pad M to a multiple of 128 so every level gets lane-aligned tiles
            # (only the tiny upper levels actually pad; cost is negligible).
            Mp = _round_up(M, 128)
            if Mp != M:
                pad = Mp - M
                cls_cm = jnp.pad(cls_cm, ((0, 0), (0, 0), (0, pad)))
                reg_cm = jnp.pad(reg_cm, ((0, 0), (0, 0), (0, pad)))

            obj_cm, cls_p, reg_p, box_p = single_level_pred(
                cls_cm, reg_cm, w_cls, b_cls, w_ro, b_ro, self.ps_mat,
                stride, W, self.num_classes, self.reg_max)

            if Mp != M:
                obj_cm = obj_cm[:, :, :M]
                cls_p = cls_p[:, :M, :]
                reg_p = reg_p[:, :M, :]
                box_p = box_p[:, :M, :]

            # obj: (B,1,M) -> (B,M,1) is a metadata-only reshape; cls/reg/box are
            # already in the torch (B, M, C) layout straight from the kernel.
            all_obj.append(obj_cm.reshape(B, M, 1))
            all_cls.append(cls_p)
            all_reg.append(reg_p)
            all_box.append(box_p)

            all_anchors.append(self.generate_anchors(stride, (H, W)))
            all_stride_t.append(jnp.full((M, 1), float(stride), jnp.float32))

        return {
            "pred_obj": all_obj,
            "pred_cls": all_cls,
            "pred_reg": all_reg,
            "pred_box": all_box,
            "anchors": all_anchors,
            "strides": self.strides,
            "stride_tensor": all_stride_t,
        }


# --------------------------- pure-JAX reference ---------------------------- #
def _ref_level(cls_flat, reg_flat, anchors, w_cls, b_cls, w_ro, b_ro,
               proj, stride, reg_max):
    k4 = 4 * reg_max
    w_reg, w_obj = w_ro[:k4], w_ro[k4:]
    b_reg, b_obj = b_ro[:k4, 0], b_ro[k4:, 0]
    obj = jnp.einsum("bmc,oc->bmo", reg_flat, w_obj) + b_obj
    cls_ = jnp.einsum("bmc,oc->bmo", cls_flat, w_cls) + b_cls[:, 0]
    reg = jnp.einsum("bmc,oc->bmo", reg_flat, w_reg) + b_reg
    B, M, _ = reg.shape
    reg4 = reg.reshape(B, M, 4, reg_max)
    p = jax.nn.softmax(reg4, axis=-1)
    dist = jnp.sum(p * proj.reshape(1, 1, 1, reg_max), axis=-1)   # (B, M, 4)
    x1y1 = anchors[None] - dist[..., :2] * stride
    x2y2 = anchors[None] + dist[..., 2:] * stride
    box = jnp.concatenate([x1y1, x2y2], axis=-1)
    return obj, cls_, reg, box


def _check(layer, cls_feats, reg_feats, fmp_sizes):
    outputs = layer(cls_feats, reg_feats)
    jax.block_until_ready(outputs)
    for level in range(layer.num_levels):
        H, W = fmp_sizes[level]
        B = cls_feats[level].shape[0]
        M = H * W
        cls_flat = jnp.transpose(cls_feats[level], (0, 2, 3, 1)).reshape(B, M, layer.cls_dim)
        reg_flat = jnp.transpose(reg_feats[level], (0, 2, 3, 1)).reshape(B, M, layer.reg_dim)
        anchors = layer.generate_anchors(layer.strides[level], (H, W))
        w_cls, b_cls, w_ro, b_ro = layer.level_params[level]
        r_obj, r_cls, r_reg, r_box = _ref_level(
            cls_flat, reg_flat, anchors, w_cls, b_cls, w_ro, b_ro,
            layer.proj, layer.strides[level], layer.reg_max)
        np.testing.assert_allclose(np.asarray(outputs["pred_obj"][level]),
                                   np.asarray(r_obj), rtol=1e-4, atol=1e-4)
        np.testing.assert_allclose(np.asarray(outputs["pred_cls"][level]),
                                   np.asarray(r_cls), rtol=1e-4, atol=1e-4)
        np.testing.assert_allclose(np.asarray(outputs["pred_reg"][level]),
                                   np.asarray(r_reg), rtol=1e-4, atol=1e-4)
        np.testing.assert_allclose(np.asarray(outputs["pred_box"][level]),
                                   np.asarray(r_box), rtol=1e-4, atol=2e-3)
    return outputs


# ---------------------------------- main ----------------------------------- #
if __name__ == "__main__":
    B = 2
    cls_dim = reg_dim = 32
    num_classes = 8
    reg_max = 16
    num_levels = 3
    strides = [8, 16, 32]
    fmp_sizes = [(16, 16), (8, 8), (4, 4)]

    key = jax.random.PRNGKey(0)
    key, pkey = jax.random.split(key)
    layer = MultiLevelPredLayerPallas(cls_dim, reg_dim, strides, num_classes,
                                      num_coords=4, num_levels=num_levels,
                                      reg_max=reg_max, key=pkey)

    cls_feats, reg_feats = [], []
    for (H, W) in fmp_sizes:
        key, k1, k2 = jax.random.split(key, 3)
        cls_feats.append(jax.random.normal(k1, (B, cls_dim, H, W), jnp.float32))
        reg_feats.append(jax.random.normal(k2, (B, reg_dim, H, W), jnp.float32))

    # 1) check with the spec init (reg weights are zero -> degenerate DFL)
    _check(layer, cls_feats, reg_feats, fmp_sizes)

    # 2) re-check with non-trivial reg weights to exercise the softmax/DFL/box path
    new_params = []
    for (w_cls, b_cls, w_ro, b_ro) in layer.level_params:
        key, kr = jax.random.split(key)
        w_reg_rand = 0.1 * jax.random.normal(kr, (4 * reg_max, reg_dim), jnp.float32)
        w_ro_rand = jnp.concatenate([w_reg_rand, w_ro[4 * reg_max:]], axis=0)
        new_params.append((w_cls, b_cls, w_ro_rand, b_ro))
    layer.level_params = new_params
    _check(layer, cls_feats, reg_feats, fmp_sizes)

    print("KERNEL_OK")
</pallas_src>

<mosaic_0001>
module attributes {stable_mosaic.version = 11 : i64} {
  func.func @_pred_kernel(%arg0: i32, %arg1: i32, %arg2: memref<1x32x256xf32, #tpu.memory_space<vmem>>, %arg3: memref<1x32x256xf32, #tpu.memory_space<vmem>>, %arg4: memref<8x32xf32, #tpu.memory_space<vmem>>, %arg5: memref<8x1xf32, #tpu.memory_space<vmem>>, %arg6: memref<65x32xf32, #tpu.memory_space<vmem>>, %arg7: memref<65x1xf32, #tpu.memory_space<vmem>>, %arg8: memref<8x64xf32, #tpu.memory_space<vmem>>, %arg9: memref<1x1x256xf32, #tpu.memory_space<vmem>>, %arg10: memref<1x256x8xf32, #tpu.memory_space<vmem>>, %arg11: memref<1x256x64xf32, #tpu.memory_space<vmem>>, %arg12: memref<1x256x4xf32, #tpu.memory_space<vmem>>) attributes {dimension_semantics = [#tpu.dimension_semantics<parallel>, #tpu.dimension_semantics<parallel>], iteration_bounds = array<i64: 2, 1>, scalar_prefetch = 0 : i64, scratch_operands = 0 : i64, tpu.core_type = #tpu.core_type<tc>, window_params = [{transform_indices = @transform_0, window_bounds = array<i64: 1, 32, 256>}, {transform_indices = @transform_1, window_bounds = array<i64: 1, 32, 256>}, {pipeline_mode = #tpu.pipeline_mode<synchronous>, transform_indices = @transform_2, window_bounds = array<i64: 8, 32>}, {pipeline_mode = #tpu.pipeline_mode<synchronous>, transform_indices = @transform_3, window_bounds = array<i64: 8, 1>}, {pipeline_mode = #tpu.pipeline_mode<synchronous>, transform_indices = @transform_4, window_bounds = array<i64: 65, 32>}, {pipeline_mode = #tpu.pipeline_mode<synchronous>, transform_indices = @transform_5, window_bounds = array<i64: 65, 1>}, {pipeline_mode = #tpu.pipeline_mode<synchronous>, transform_indices = @transform_6, window_bounds = array<i64: 8, 64>}, {transform_indices = @transform_7, window_bounds = array<i64: 1, 1, 256>}, {transform_indices = @transform_8, window_bounds = array<i64: 1, 256, 8>}, {transform_indices = @transform_9, window_bounds = array<i64: 1, 256, 64>}, {transform_indices = @transform_10, window_bounds = array<i64: 1, 256, 4>}]} {
    %c0 = arith.constant 0 : index
    %c0_0 = arith.constant 0 : index
    %c0_1 = arith.constant 0 : index
    %0 = vector.load %arg2[%c0, %c0_0, %c0_1] : memref<1x32x256xf32, #tpu.memory_space<vmem>>, vector<1x32x256xf32>
    %1 = vector.shape_cast %0 : vector<1x32x256xf32> to vector<32x256xf32>
    %c0_2 = arith.constant 0 : index
    %c0_3 = arith.constant 0 : index
    %c0_4 = arith.constant 0 : index
    %2 = vector.load %arg3[%c0_2, %c0_3, %c0_4] : memref<1x32x256xf32, #tpu.memory_space<vmem>>, vector<1x32x256xf32>
    %3 = vector.shape_cast %2 : vector<1x32x256xf32> to vector<32x256xf32>
    %c0_5 = arith.constant 0 : index
    %c0_6 = arith.constant 0 : index
    %4 = vector.load %arg6[%c0_5, %c0_6] : memref<65x32xf32, #tpu.memory_space<vmem>>, vector<65x32xf32>
    %cst = arith.constant dense<0.000000e+00> : vector<65x256xf32>
    %5 = tpu.matmul %4, %3, %cst {dimension_numbers = #tpu.dot_dimension_numbers<[1], [0], [0], [1], [0, 0, 1, 1], [], []>} : vector<65x32xf32>, vector<32x256xf32>, vector<65x256xf32> -> vector<65x256xf32>
    %c0_7 = arith.constant 0 : index
    %c0_8 = arith.constant 0 : index
    %6 = vector.load %arg7[%c0_7, %c0_8] : memref<65x1xf32, #tpu.memory_space<vmem>>, vector<65x1xf32>
    %7 = vector.broadcast %6 : vector<65x1xf32> to vector<65x256xf32>
    %8 = arith.addf %5, %7 : vector<65x256xf32>
    %c0_9 = arith.constant 0 : index
    %c0_10 = arith.constant 0 : index
    %9 = vector.load %arg4[%c0_9, %c0_10] : memref<8x32xf32, #tpu.memory_space<vmem>>, vector<8x32xf32>
    %cst_11 = arith.constant dense<0.000000e+00> : vector<8x256xf32>
    %10 = tpu.matmul %9, %1, %cst_11 {dimension_numbers = #tpu.dot_dimension_numbers<[1], [0], [0], [1], [0, 0, 1, 1], [], []>} : vector<8x32xf32>, vector<32x256xf32>, vector<8x256xf32> -> vector<8x256xf32>
    %c0_12 = arith.constant 0 : index
    %c0_13 = arith.constant 0 : index
    %11 = vector.load %arg5[%c0_12, %c0_13] : memref<8x1xf32, #tpu.memory_space<vmem>>, vector<8x1xf32>
    %12 = vector.broadcast %11 : vector<8x1xf32> to vector<8x256xf32>
    %13 = arith.addf %10, %12 : vector<8x256xf32>
    %14 = vector.extract_strided_slice %8 {offsets = [0, 0], sizes = [64, 256], strides = [1, 1]} : vector<65x256xf32> to vector<64x256xf32>
    %15 = vector.extract_strided_slice %8 {offsets = [64, 0], sizes = [1, 256], strides = [1, 1]} : vector<65x256xf32> to vector<1x256xf32>
    %c0_14 = arith.constant 0 : index
    %c0_15 = arith.constant 0 : index
    %c0_16 = arith.constant 0 : index
    %16 = vector.load %arg9[%c0_14, %c0_15, %c0_16] : memref<1x1x256xf32, #tpu.memory_space<vmem>>, vector<1x1x256xf32>
    %17 = vector.shape_cast %16 : vector<1x1x256xf32> to vector<1x256xf32>
    %18 = vector.shape_cast %15 : vector<1x256xf32> to vector<1x1x256xf32>
    tpu.vector_store %arg9[%c0_14, %c0_15, %c0_16], %18 {strides = array<i32>} : memref<1x1x256xf32, #tpu.memory_space<vmem>>, vector<1x1x256xf32>,
    %19 = vector.extract_strided_slice %14 {offsets = [0, 0], sizes = [16, 256], strides = [1, 1]} : vector<64x256xf32> to vector<16x256xf32>
    %cst_17 = arith.constant dense<0xFF800000> : vector<256xf32>
    %20 = vector.multi_reduction <maximumf>, %19, %cst_17 [0] : vector<16x256xf32> to vector<256xf32>
    %21 = vector.shape_cast %20 : vector<256xf32> to vector<1x256xf32>
    %22 = vector.broadcast %21 : vector<1x256xf32> to vector<16x256xf32>
    %23 = arith.subf %19, %22 : vector<16x256xf32>
    %24 = math.exp %23 : vector<16x256xf32>
    %25 = vector.extract_strided_slice %14 {offsets = [16, 0], sizes = [16, 256], strides = [1, 1]} : vector<64x256xf32> to vector<16x256xf32>
    %cst_18 = arith.constant dense<0xFF800000> : vector<256xf32>
    %26 = vector.multi_reduction <maximumf>, %25, %cst_18 [0] : vector<16x256xf32> to vector<256xf32>
    %27 = vector.shape_cast %26 : vector<256xf32> to vector<1x256xf32>
    %28 = vector.broadcast %27 : vector<1x256xf32> to vector<16x256xf32>
    %29 = arith.subf %25, %28 : vector<16x256xf32>
    %30 = math.exp %29 : vector<16x256xf32>
    %31 = vector.extract_strided_slice %14 {offsets = [32, 0], sizes = [16, 256], strides = [1, 1]} : vector<64x256xf32> to vector<16x256xf32>
    %cst_19 = arith.constant dense<0xFF800000> : vector<256xf32>
    %32 = vector.multi_reduction <maximumf>, %31, %cst_19 [0] : vector<16x256xf32> to vector<256xf32>
    %33 = vector.shape_cast %32 : vector<256xf32> to vector<1x256xf32>
    %34 = vector.broadcast %33 : vector<1x256xf32> to vector<16x256xf32>
    %35 = arith.subf %31, %34 : vector<16x256xf32>
    %36 = math.exp %35 : vector<16x256xf32>
    %37 = vector.extract_strided_slice %14 {offsets = [48, 0], sizes = [16, 256], strides = [1, 1]} : vector<64x256xf32> to vector<16x256xf32>
    %cst_20 = arith.constant dense<0xFF800000> : vector<256xf32>
    %38 = vector.multi_reduction <maximumf>, %37, %cst_20 [0] : vector<16x256xf32> to vector<256xf32>
    %39 = vector.shape_cast %38 : vector<256xf32> to vector<1x256xf32>
    %40 = vector.broadcast %39 : vector<1x256xf32> to vector<16x256xf32>
    %41 = arith.subf %37, %40 : vector<16x256xf32>
    %42 = math.exp %41 : vector<16x256xf32>
    %43 = tpu.concatenate %24, %30, %36, %42 in 0 : vector<16x256xf32>, vector<16x256xf32>, vector<16x256xf32>, vector<16x256xf32> -> vector<64x256xf32>
    %c0_21 = arith.constant 0 : index
    %c0_22 = arith.constant 0 : index
    %44 = vector.load %arg8[%c0_21, %c0_22] : memref<8x64xf32, #tpu.memory_space<vmem>>, vector<8x64xf32>
    %cst_23 = arith.constant dense<0.000000e+00> : vector<8x256xf32>
    %45 = tpu.matmul %44, %43, %cst_23 {dimension_numbers = #tpu.dot_dimension_numbers<[1], [0], [0], [1], [0, 0, 1, 1], [], []>} : vector<8x64xf32>, vector<64x256xf32>, vector<8x256xf32> -> vector<8x256xf32>
    %46 = vector.extract_strided_slice %45 {offsets = [0, 0], sizes = [4, 256], strides = [1, 1]} : vector<8x256xf32> to vector<4x256xf32>
    %47 = vector.extract_strided_slice %45 {offsets = [4, 0], sizes = [4, 256], strides = [1, 1]} : vector<8x256xf32> to vector<4x256xf32>
    %48 = arith.divf %46, %47 : vector<4x256xf32>
    %49 = tpu.iota {dimensions = array<i32: 1>} : vector<1x256xi32>
    %c256_i32 = arith.constant 256 : i32
    %50 = arith.muli %arg1, %c256_i32 : i32
    %51 = vector.broadcast %50 : i32 to vector<1x256xi32>
    %52 = arith.addi %49, %51 : vector<1x256xi32>
    %53 = arith.sitofp %52 : vector<1x256xi32> to vector<1x256xf32>
    %cst_24 = arith.constant 1.600000e+01 : f32
    %54 = vector.broadcast %cst_24 : f32 to vector<1x256xf32>
    %55 = arith.divf %53, %54 : vector<1x256xf32>
    %56 = math.floor %55 : vector<1x256xf32>
    %cst_25 = arith.constant 1.600000e+01 : f32
    %57 = vector.broadcast %cst_25 : f32 to vector<1x256xf32>
    %58 = arith.mulf %56, %57 : vector<1x256xf32>
    %59 = arith.subf %53, %58 : vector<1x256xf32>
    %cst_26 = arith.constant 5.000000e-01 : f32
    %60 = vector.broadcast %cst_26 : f32 to vector<1x256xf32>
    %61 = arith.addf %59, %60 : vector<1x256xf32>
    %cst_27 = arith.constant 8.000000e+00 : f32
    %62 = vector.broadcast %cst_27 : f32 to vector<1x256xf32>
    %63 = arith.mulf %61, %62 : vector<1x256xf32>
    %cst_28 = arith.constant 5.000000e-01 : f32
    %64 = vector.broadcast %cst_28 : f32 to vector<1x256xf32>
    %65 = arith.addf %56, %64 : vector<1x256xf32>
    %cst_29 = arith.constant 8.000000e+00 : f32
    %66 = vector.broadcast %cst_29 : f32 to vector<1x256xf32>
    %67 = arith.mulf %65, %66 : vector<1x256xf32>
    %68 = tpu.concatenate %63, %67, %63, %67 in 0 : vector<1x256xf32>, vector<1x256xf32>, vector<1x256xf32>, vector<1x256xf32> -> vector<4x256xf32>
    %cst_30 = arith.constant 8.000000e+00 : f32
    %69 = vector.broadcast %cst_30 : f32 to vector<4x256xf32>
    %70 = arith.mulf %48, %69 : vector<4x256xf32>
    %71 = arith.addf %68, %70 : vector<4x256xf32>
    %72 = tpu.transpose %14, [1, 0] : vector<64x256xf32> -> vector<256x64xf32>
    %c0_31 = arith.constant 0 : index
    %c0_32 = arith.constant 0 : index
    %c0_33 = arith.constant 0 : index
    %73 = vector.load %arg11[%c0_31, %c0_32, %c0_33] : memref<1x256x64xf32, #tpu.memory_space<vmem>>, vector<1x256x64xf32>
    %74 = vector.shape_cast %73 : vector<1x256x64xf32> to vector<256x64xf32>
    %75 = vector.shape_cast %72 : vector<256x64xf32> to vector<1x256x64xf32>
    tpu.vector_store %arg11[%c0_31, %c0_32, %c0_33], %75 {strides = array<i32>} : memref<1x256x64xf32, #tpu.memory_space<vmem>>, vector<1x256x64xf32>,
    %76 = tpu.transpose %13, [1, 0] : vector<8x256xf32> -> vector<256x8xf32>
    %c0_34 = arith.constant 0 : index
    %c0_35 = arith.constant 0 : index
    %c0_36 = arith.constant 0 : index
    %77 = vector.load %arg10[%c0_34, %c0_35, %c0_36] : memref<1x256x8xf32, #tpu.memory_space<vmem>>, vector<1x256x8xf32>
    %78 = vector.shape_cast %77 : vector<1x256x8xf32> to vector<256x8xf32>
    %79 = vector.shape_cast %76 : vector<256x8xf32> to vector<1x256x8xf32>
    tpu.vector_store %arg10[%c0_34, %c0_35, %c0_36], %79 {strides = array<i32>} : memref<1x256x8xf32, #tpu.memory_space<vmem>>, vector<1x256x8xf32>,
    %cst_37 = arith.constant 0.000000e+00 : f32
    %80 = vector.broadcast %cst_37 : f32 to vector<4x256xf32>
    %81 = tpu.concatenate %71, %80 in 0 : vector<4x256xf32>, vector<4x256xf32> -> vector<8x256xf32>
    %82 = tpu.transpose %81, [1, 0] : vector<8x256xf32> -> vector<256x8xf32>
    %83 = vector.extract_strided_slice %82 {offsets = [0, 0], sizes = [256, 4], strides = [1, 1]} : vector<256x8xf32> to vector<256x4xf32>
    %c0_38 = arith.constant 0 : index
    %c0_39 = arith.constant 0 : index
    %c0_40 = arith.constant 0 : index
    %84 = vector.load %arg12[%c0_38, %c0_39, %c0_40] : memref<1x256x4xf32, #tpu.memory_space<vmem>>, vector<1x256x4xf32>
    %85 = vector.shape_cast %84 : vector<1x256x4xf32> to vector<256x4xf32>
    %86 = vector.shape_cast %83 : vector<256x4xf32> to vector<1x256x4xf32>
    tpu.vector_store %arg12[%c0_38, %c0_39, %c0_40], %86 {strides = array<i32>} : memref<1x256x4xf32, #tpu.memory_space<vmem>>, vector<1x256x4xf32>,
    return
  }
  func.func @transform_0(%arg0: i32, %arg1: i32) -> (i32, i32, i32) {
    %c0_i32 = arith.constant 0 : i32
    %c0_i32_0 = arith.constant 0 : i32
    return %arg0, %c0_i32, %arg1 : i32, i32, i32
  }
  func.func @transform_1(%arg0: i32, %arg1: i32) -> (i32, i32, i32) {
    %c0_i32 = arith.constant 0 : i32
    %c0_i32_0 = arith.constant 0 : i32
    return %arg0, %c0_i32, %arg1 : i32, i32, i32
  }
  func.func @transform_2(%arg0: i32, %arg1: i32) -> (i32, i32) {
    %c0_i32 = arith.constant 0 : i32
    %c0_i32_0 = arith.constant 0 : i32
    %c0_i32_1 = arith.constant 0 : i32
    return %c0_i32, %c0_i32_0 : i32, i32
  }
  func.func @transform_3(%arg0: i32, %arg1: i32) -> (i32, i32) {
    %c0_i32 = arith.constant 0 : i32
    %c0_i32_0 = arith.constant 0 : i32
    %c0_i32_1 = arith.constant 0 : i32
    return %c0_i32, %c0_i32_0 : i32, i32
  }
  func.func @transform_4(%arg0: i32, %arg1: i32) -> (i32, i32) {
    %c0_i32 = arith.constant 0 : i32
    %c0_i32_0 = arith.constant 0 : i32
    %c0_i32_1 = arith.constant 0 : i32
    return %c0_i32, %c0_i32_0 : i32, i32
  }
  func.func @transform_5(%arg0: i32, %arg1: i32) -> (i32, i32) {
    %c0_i32 = arith.constant 0 : i32
    %c0_i32_0 = arith.constant 0 : i32
    %c0_i32_1 = arith.constant 0 : i32
    return %c0_i32, %c0_i32_0 : i32, i32
  }
  func.func @transform_6(%arg0: i32, %arg1: i32) -> (i32, i32) {
    %c0_i32 = arith.constant 0 : i32
    %c0_i32_0 = arith.constant 0 : i32
    %c0_i32_1 = arith.constant 0 : i32
    return %c0_i32, %c0_i32_0 : i32, i32
  }
  func.func @transform_7(%arg0: i32, %arg1: i32) -> (i32, i32, i32) {
    %c0_i32 = arith.constant 0 : i32
    %c0_i32_0 = arith.constant 0 : i32
    return %arg0, %c0_i32, %arg1 : i32, i32, i32
  }
  func.func @transform_8(%arg0: i32, %arg1: i32) -> (i32, i32, i32) {
    %c0_i32 = arith.constant 0 : i32
    %c0_i32_0 = arith.constant 0 : i32
    return %arg0, %arg1, %c0_i32 : i32, i32, i32
  }
  func.func @transform_9(%arg0: i32, %arg1: i32) -> (i32, i32, i32) {
    %c0_i32 = arith.constant 0 : i32
    %c0_i32_0 = arith.constant 0 : i32
    return %arg0, %arg1, %c0_i32 : i32, i32, i32
  }
  func.func @transform_10(%arg0: i32, %arg1: i32) -> (i32, i32, i32) {
    %c0_i32 = arith.constant 0 : i32
    %c0_i32_0 = arith.constant 0 : i32
    return %arg0, %arg1, %c0_i32 : i32, i32, i32
  }
}

</mosaic_0001>

<llo_original>
// kernel: tpu_custom_call.1
$region0: #{tpu_custom_call.1}
  #allocation0 [shape = 'u32[]', space=smem, size = 0x4, offset = 0x4, fixed_abs, tag = 'smem constant byte address 0x4 - core index']
  #allocation1 [shape = 'u32[144,128]{1,0:T(1,128)}', space=vmem, size = 0x12000, scoped, tag = 'internal scratch']
  %s0 = inlined_call_operand.vmem [shape: f32[2,32,256], index: 0, kind: input, shape index: {}]
  %s1 = inlined_call_operand.hbm [shape: f32[2,32,256], index: 1, kind: input, shape index: {}]
  %s2 = inlined_call_operand.vmem [shape: f32[8,32], index: 2, kind: input, shape index: {}]
  %s3 = inlined_call_operand.vmem [shape: f32[8,1], index: 3, kind: input, shape index: {}]
  %s4 = inlined_call_operand.vmem [shape: f32[65,32], index: 4, kind: input, shape index: {}]
  %s5 = inlined_call_operand.vmem [shape: f32[65,1], index: 5, kind: input, shape index: {}]
  %s6 = inlined_call_operand.vmem [shape: f32[8,64], index: 6, kind: input, shape index: {}]
  %s7 = inlined_call_operand.hbm [shape: f32[2,1,256], index: 7, kind: output, shape index: {0}]
  %s8 = inlined_call_operand.vmem [shape: f32[2,256,8], index: 8, kind: output, shape index: {1}]
  %s9 = inlined_call_operand.vmem [shape: f32[2,256,64], index: 9, kind: output, shape index: {2}]
  %s10 = inlined_call_operand.vmem [shape: f32[2,256,4], index: 10, kind: output, shape index: {3}]
  %11 = xla_tuple %s7, %s8, %s9, %s10
  %s12 = sld [smem:[#allocation0]]
  $region89: #{tpu_custom_call.1} parent=0
    _
  %s14 = ssub.s32 1, %s12
  %s15 = scalar_select 0, %s14, %s12
  $region1: #{tpu_custom_call.1} parent=0
    #allocation2 [shape = 'u8[65536]{0}', space=vmem, size = 0x10000, scoped, tag = 'input window, operand 1']
    #allocation3 [shape = 's32[2]{0}', space=sflag, size = 0x8, scoped, tag = 'scoped memory for tpu_custom_call.1']
    #allocation4 [shape = 's32[2]{0}', space=sflag, size = 0x8, scoped, tag = 'scoped memory for tpu_custom_call.1']
    #allocation5 [shape = 'u8[2048]{0}', space=vmem, size = 0x800, scoped, tag = 'output window, operand 0']
    %16 = vsyncpa [#allocation3], 0
    %s17 = scalar_lea.sflag [#allocation3], 1
    %18 = vsyncpa %s17, 0
    %19 = vsyncpa [#allocation4], 0
    %s20 = scalar_lea.sflag [#allocation4], 1
    %21 = vsyncpa %s20, 0
    loop: start=0, step=1, limit=4
    $region2: #{tpu_custom_call.1} parent=1 // loop_pre_header
      _
    $region3: #{tpu_custom_call.1} parent=1 // loop_header
      %s23 = sphi 0, %s27
      %p24 = scmp.ge.s32.totalorder %s23, 4
      %s30 = sphi 0, %s42
      %s31 = sphi 0, %s38
      %s32 = sphi 0, %s30
      %s33 = sphi 0, %s31
      %s34 = sphi 0, %s32
      %s35 = sphi 0, %s33
      %s47 = sphi 0, %s49
      %s50 = sphi 0, %s47
      %s51 = sphi 0, %s50
      %s67 = sphi 0, %s51
      %s75 = sphi 0, %s77
      %s78 = sphi 0, %s75
      %s79 = sphi 0, %s78
      %s95 = sphi 0, %s79
      %s99 = sphi 0, %s99
      %s101 = sphi 0, %s99
      %s102 = sphi 0, %s101
      %s116 = sphi 0, %s102
      %s120 = sphi 0, %s120
      %s122 = sphi 0, %s120
      %s123 = sphi 0, %s122
      %s137 = sphi 0, %s123
      %s141 = sphi 0, %s141
      %s143 = sphi 0, %s141
      %s144 = sphi 0, %s143
      %s158 = sphi 0, %s144
      %s162 = sphi 0, %s162
      %s164 = sphi 0, %s162
      %s165 = sphi 0, %s164
      %s179 = sphi 0, %s165
      %s183 = sphi 0, %s183
      %s185 = sphi 0, %s183
      %s186 = sphi 0, %s185
      %s200 = sphi 0, %s186
      %s208 = sphi 0, %s210
      %s211 = sphi 0, %s208
      %s212 = sphi 0, %s211
      %s228 = sphi 0, %s212
      %s236 = sphi 0, %s238
      %s239 = sphi 0, %s236
      %s240 = sphi 0, %s239
      %s256 = sphi 0, %s240
      %s264 = sphi 0, %s266
      %s267 = sphi 0, %s264
      %s268 = sphi 0, %s267
      %s284 = sphi 0, %s268
      %s292 = sphi 0, %s294
      %s295 = sphi 0, %s292
      %s296 = sphi 0, %s295
      %s312 = sphi 0, %s296
    $region4: #{tpu_custom_call.1} parent=1 // loop_header_branch
      %26 = sbr.rel (%p24) target = $region8
    $region5: #{tpu_custom_call.1} parent=1 // loop_body
      %s28 = ssub.s32 %s23, 1
      %s29 = ssub.s32 %s23, 2
      %s36 = sadd.s32 1, %s31
      %p37 = scmp.ge.s32.totalorder %s36, 1
      %s38 = scalar_select %p37, 0, %s36
      %s39 = sadd.s32 1, %s30
      %s40 = scalar_select %p37, %s39, %s30
      %p41 = scmp.ge.s32.totalorder %s40, 2
      %s42 = scalar_select %p41, 0, %s40
      %s43 = ssub.s32 %s30, %s42
      %s44 = ssub.s32 %s31, %s38
      %s45 = sor.u32 %s43, %s44
      %p46 = scmp.eq.s32.totalorder %s45, 0
      %s48 = sadd.s32 %s47, 1
      %s49 = scalar_select %p46, %s47, %s48
      %p52 = pneg %p46
      %p53 = scmp.eq.s32.totalorder %s23, 1
      %p54 = por %p52, %p53
      %p55 = scmp.ne.s32.totalorder %s47, %s50
      %p56 = scmp.eq.s32.totalorder %s23, 0
      %p57 = por %p55, %p56
      %p58 = scmp.ne.s32.totalorder %s47, %s50
      %p59 = scmp.eq.s32.totalorder %s28, 1
      %p60 = por %p58, %p59
      %p61 = scmp.ne.s32.totalorder %s50, %s51
      %p62 = scmp.eq.s32.totalorder %s28, 0
      %p63 = por %p61, %p62
      %p64 = scmp.ne.s32.totalorder %s50, %s51
      %p65 = scmp.eq.s32.totalorder %s29, 1
      %p66 = por %p64, %p65
      %p68 = scmp.ne.s32.totalorder %s51, %s67
      %p69 = scmp.eq.s32.totalorder %s29, 0
      %p70 = por %p68, %p69
      %s71 = ssub.s32 %s30, %s42
      %s72 = ssub.s32 %s31, %s38
      %s73 = sor.u32 %s71, %s72
      %p74 = scmp.eq.s32.totalorder %s73, 0
      %s76 = sadd.s32 %s75, 1
      %s77 = scalar_select %p74, %s75, %s76
      %p80 = pneg %p74
      %p81 = scmp.eq.s32.totalorder %s23, 1
      %p82 = por %p80, %p81
      %p83 = scmp.ne.s32.totalorder %s75, %s78
      %p84 = scmp.eq.s32.totalorder %s23, 0
      %p85 = por %p83, %p84
      %p86 = scmp.ne.s32.totalorder %s75, %s78
      %p87 = scmp.eq.s32.totalorder %s28, 1
      %p88 = por %p86, %p87
      %p89 = scmp.ne.s32.totalorder %s78, %s79
      %p90 = scmp.eq.s32.totalorder %s28, 0
      %p91 = por %p89, %p90
      %p92 = scmp.ne.s32.totalorder %s78, %s79
      %p93 = scmp.eq.s32.totalorder %s29, 1
      %p94 = por %p92, %p93
      %p96 = scmp.ne.s32.totalorder %s79, %s95
      %p97 = scmp.eq.s32.totalorder %s29, 0
      %p98 = por %p96, %p97
      %s100 = sadd.s32 %s99, 1
      %p103 = scmp.eq.s32.totalorder %s23, 1
      %p104 = scmp.ne.s32.totalorder %s99, %s101
      %p105 = scmp.eq.s32.totalorder %s23, 0
      %p106 = por %p104, %p105
      %p107 = scmp.ne.s32.totalorder %s99, %s101
      %p108 = scmp.eq.s32.totalorder %s28, 1
      %p109 = por %p107, %p108
      %p110 = scmp.ne.s32.totalorder %s101, %s102
      %p111 = scmp.eq.s32.totalorder %s28, 0
      %p112 = por %p110, %p111
      %p113 = scmp.ne.s32.totalorder %s101, %s102
      %p114 = scmp.eq.s32.totalorder %s29, 1
      %p115 = por %p113, %p114
      %p117 = scmp.ne.s32.totalorder %s102, %s116
      %p118 = scmp.eq.s32.totalorder %s29, 0
      %p119 = por %p117, %p118
      %s121 = sadd.s32 %s120, 1
      %p124 = scmp.eq.s32.totalorder %s23, 1
      %p125 = scmp.ne.s32.totalorder %s120, %s122
      %p126 = scmp.eq.s32.totalorder %s23, 0
      %p127 = por %p125, %p126
      %p128 = scmp.ne.s32.totalorder %s120, %s122
      %p129 = scmp.eq.s32.totalorder %s28, 1
      %p130 = por %p128, %p129
      %p131 = scmp.ne.s32.totalorder %s122, %s123
      %p132 = scmp.eq.s32.totalorder %s28, 0
      %p133 = por %p131, %p132
      %p134 = scmp.ne.s32.totalorder %s122, %s123
      %p135 = scmp.eq.s32.totalorder %s29, 1
      %p136 = por %p134, %p135
      %p138 = scmp.ne.s32.totalorder %s123, %s137
      %p139 = scmp.eq.s32.totalorder %s29, 0
      %p140 = por %p138, %p139
      %s142 = sadd.s32 %s141, 1
      %p145 = scmp.eq.s32.totalorder %s23, 1
      %p146 = scmp.ne.s32.totalorder %s141, %s143
      %p147 = scmp.eq.s32.totalorder %s23, 0
      %p148 = por %p146, %p147
      %p149 = scmp.ne.s32.totalorder %s141, %s143
      %p150 = scmp.eq.s32.totalorder %s28, 1
      %p151 = por %p149, %p150
      %p152 = scmp.ne.s32.totalorder %s143, %s144
      %p153 = scmp.eq.s32.totalorder %s28, 0
      %p154 = por %p152, %p153
      %p155 = scmp.ne.s32.totalorder %s143, %s144
      %p156 = scmp.eq.s32.totalorder %s29, 1
      %p157 = por %p155, %p156
      %p159 = scmp.ne.s32.totalorder %s144, %s158
      %p160 = scmp.eq.s32.totalorder %s29, 0
      %p161 = por %p159, %p160
      %s163 = sadd.s32 %s162, 1
      %p166 = scmp.eq.s32.totalorder %s23, 1
      %p167 = scmp.ne.s32.totalorder %s162, %s164
      %p168 = scmp.eq.s32.totalorder %s23, 0
      %p169 = por %p167, %p168
      %p170 = scmp.ne.s32.totalorder %s162, %s164
      %p171 = scmp.eq.s32.totalorder %s28, 1
      %p172 = por %p170, %p171
      %p173 = scmp.ne.s32.totalorder %s164, %s165
      %p174 = scmp.eq.s32.totalorder %s28, 0
      %p175 = por %p173, %p174
      %p176 = scmp.ne.s32.totalorder %s164, %s165
      %p177 = scmp.eq.s32.totalorder %s29, 1
      %p178 = por %p176, %p177
      %p180 = scmp.ne.s32.totalorder %s165, %s179
      %p181 = scmp.eq.s32.totalorder %s29, 0
      %p182 = por %p180, %p181
      %s184 = sadd.s32 %s183, 1
      %p187 = scmp.eq.s32.totalorder %s23, 1
      %p188 = scmp.ne.s32.totalorder %s183, %s185
      %p189 = scmp.eq.s32.totalorder %s23, 0
      %p190 = por %p188, %p189
      %p191 = scmp.ne.s32.totalorder %s183, %s185
      %p192 = scmp.eq.s32.totalorder %s28, 1
      %p193 = por %p191, %p192
      %p194 = scmp.ne.s32.totalorder %s185, %s186
      %p195 = scmp.eq.s32.totalorder %s28, 0
      %p196 = por %p194, %p195
      %p197 = scmp.ne.s32.totalorder %s185, %s186
      %p198 = scmp.eq.s32.totalorder %s29, 1
      %p199 = por %p197, %p198
      %p201 = scmp.ne.s32.totalorder %s186, %s200
      %p202 = scmp.eq.s32.totalorder %s29, 0
      %p203 = por %p201, %p202
      %s204 = ssub.s32 %s30, %s42
      %s205 = ssub.s32 %s31, %s38
      %s206 = sor.u32 %s204, %s205
      %p207 = scmp.eq.s32.totalorder %s206, 0
      %s209 = sadd.s32 %s208, 1
      %s210 = scalar_select %p207, %s208, %s209
      %p213 = pneg %p207
      %p214 = scmp.eq.s32.totalorder %s23, 1
      %p215 = por %p213, %p214
      %p216 = scmp.ne.s32.totalorder %s208, %s211
      %p217 = scmp.eq.s32.totalorder %s23, 0
      %p218 = por %p216, %p217
      %p219 = scmp.ne.s32.totalorder %s208, %s211
      %p220 = scmp.eq.s32.totalorder %s28, 1
      %p221 = por %p219, %p220
      %p222 = scmp.ne.s32.totalorder %s211, %s212
      %p223 = scmp.eq.s32.totalorder %s28, 0
      %p224 = por %p222, %p223
      %p225 = scmp.ne.s32.totalorder %s211, %s212
      %p226 = scmp.eq.s32.totalorder %s29, 1
      %p227 = por %p225, %p226
      %p229 = scmp.ne.s32.totalorder %s212, %s228
      %p230 = scmp.eq.s32.totalorder %s29, 0
      %p231 = por %p229, %p230
      %s232 = ssub.s32 %s30, %s42
      %s233 = ssub.s32 %s31, %s38
      %s234 = sor.u32 %s232, %s233
      %p235 = scmp.eq.s32.totalorder %s234, 0
      %s237 = sadd.s32 %s236, 1
      %s238 = scalar_select %p235, %s236, %s237
      %p241 = pneg %p235
      %p242 = scmp.eq.s32.totalorder %s23, 1
      %p243 = por %p241, %p242
      %p244 = scmp.ne.s32.totalorder %s236, %s239
      %p245 = scmp.eq.s32.totalorder %s23, 0
      %p246 = por %p244, %p245
      %p247 = scmp.ne.s32.totalorder %s236, %s239
      %p248 = scmp.eq.s32.totalorder %s28, 1
      %p249 = por %p247, %p248
      %p250 = scmp.ne.s32.totalorder %s239, %s240
      %p251 = scmp.eq.s32.totalorder %s28, 0
      %p252 = por %p250, %p251
      %p253 = scmp.ne.s32.totalorder %s239, %s240
      %p254 = scmp.eq.s32.totalorder %s29, 1
      %p255 = por %p253, %p254
      %p257 = scmp.ne.s32.totalorder %s240, %s256
      %p258 = scmp.eq.s32.totalorder %s29, 0
      %p259 = por %p257, %p258
      %s260 = ssub.s32 %s30, %s42
      %s261 = ssub.s32 %s31, %s38
      %s262 = sor.u32 %s260, %s261
      %p263 = scmp.eq.s32.totalorder %s262, 0
      %s265 = sadd.s32 %s264, 1
      %s266 = scalar_select %p263, %s264, %s265
      %p269 = pneg %p263
      %p270 = scmp.eq.s32.totalorder %s23, 1
      %p271 = por %p269, %p270
      %p272 = scmp.ne.s32.totalorder %s264, %s267
      %p273 = scmp.eq.s32.totalorder %s23, 0
      %p274 = por %p272, %p273
      %p275 = scmp.ne.s32.totalorder %s264, %s267
      %p276 = scmp.eq.s32.totalorder %s28, 1
      %p277 = por %p275, %p276
      %p278 = scmp.ne.s32.totalorder %s267, %s268
      %p279 = scmp.eq.s32.totalorder %s28, 0
      %p280 = por %p278, %p279
      %p281 = scmp.ne.s32.totalorder %s267, %s268
      %p282 = scmp.eq.s32.totalorder %s29, 1
      %p283 = por %p281, %p282
      %p285 = scmp.ne.s32.totalorder %s268, %s284
      %p286 = scmp.eq.s32.totalorder %s29, 0
      %p287 = por %p285, %p286
      %s288 = ssub.s32 %s30, %s42
      %s289 = ssub.s32 %s31, %s38
      %s290 = sor.u32 %s288, %s289
      %p291 = scmp.eq.s32.totalorder %s290, 0
      %s293 = sadd.s32 %s292, 1
      %s294 = scalar_select %p291, %s292, %s293
      %p297 = pneg %p291
      %p298 = scmp.eq.s32.totalorder %s23, 1
      %p299 = por %p297, %p298
      %p300 = scmp.ne.s32.totalorder %s292, %s295
      %p301 = scmp.eq.s32.totalorder %s23, 0
      %p302 = por %p300, %p301
      %p303 = scmp.ne.s32.totalorder %s292, %s295
      %p304 = scmp.eq.s32.totalorder %s28, 1
      %p305 = por %p303, %p304
      %p306 = scmp.ne.s32.totalorder %s295, %s296
      %p307 = scmp.eq.s32.totalorder %s28, 0
      %p308 = por %p306, %p307
      %p309 = scmp.ne.s32.totalorder %s295, %s296
      %p310 = scmp.eq.s32.totalorder %s29, 1
      %p311 = por %p309, %p310
      %p313 = scmp.ne.s32.totalorder %s296, %s312
      %p314 = scmp.eq.s32.totalorder %s29, 0
      %p315 = por %p313, %p314
      %p316 = scmp.le.s32.totalorder 1, %s23
      %p317 = scmp.lt.s32.totalorder %s23, 3
      %p318 = pnand %p316, %p317
      %p319 = pneg %p318
      // Predicated region
      $region9: #{tpu_custom_call.1} parent=5 // pred_check
        _
      $region10: #{tpu_custom_call.1} parent=5 // pred_check_branch
        %321 = sbr.rel (%p318) target = $region12
      $region11: #{tpu_custom_call.1} parent=5 // pred_region
        %s322 = ssub.s32 %s23, 1
        // Predicated region
        $region13: #{tpu_custom_call.1} parent=11 // pred_check
          %p323 = pneg %p112
        $region14: #{tpu_custom_call.1} parent=11 // pred_check_branch
          %325 = sbr.rel (%p323) target = $region16
        $region15: #{tpu_custom_call.1} parent=11 // pred_region
          _
        $region16: #{tpu_custom_call.1} parent=11 // pred_fallthru
          _
        // Predicated region
        $region17: #{tpu_custom_call.1} parent=11 // pred_check
          %p326 = pneg %p133
        $region18: #{tpu_custom_call.1} parent=11 // pred_check_branch
          %328 = sbr.rel (%p326) target = $region20
        $region19: #{tpu_custom_call.1} parent=11 // pred_region
          _
        $region20: #{tpu_custom_call.1} parent=11 // pred_fallthru
          _
        // Predicated region
        $region21: #{tpu_custom_call.1} parent=11 // pred_check
          %p329 = pneg %p154
        $region22: #{tpu_custom_call.1} parent=11 // pred_check_branch
          %331 = sbr.rel (%p329) target = $region24
        $region23: #{tpu_custom_call.1} parent=11 // pred_region
          _
        $region24: #{tpu_custom_call.1} parent=11 // pred_fallthru
          _
        // Predicated region
        $region25: #{tpu_custom_call.1} parent=11 // pred_check
          %p332 = pneg %p175
        $region26: #{tpu_custom_call.1} parent=11 // pred_check_branch
          %334 = sbr.rel (%p332) target = $region28
        $region27: #{tpu_custom_call.1} parent=11 // pred_region
          _
        $region28: #{tpu_custom_call.1} parent=11 // pred_fallthru
          _
        // Predicated region
        $region29: #{tpu_custom_call.1} parent=11 // pred_check
          %p335 = pneg %p196
        $region30: #{tpu_custom_call.1} parent=11 // pred_check_branch
          %337 = sbr.rel (%p335) target = $region32
        $region31: #{tpu_custom_call.1} parent=11 // pred_region
          _
        $region32: #{tpu_custom_call.1} parent=11 // pred_fallthru
          _
      $region12: #{tpu_custom_call.1} parent=5 // pred_fallthru
        _
      %p338 = scmp.lt.s32.totalorder %s23, 2
      // Predicated region
      $region33: #{tpu_custom_call.1} parent=5 // pred_check
        %p339 = pneg %p338
      $region34: #{tpu_custom_call.1} parent=5 // pred_check_branch
        %341 = sbr.rel (%p339) target = $region36
      $region35: #{tpu_custom_call.1} parent=5 // pred_region
        // Predicated region
        $region37: #{tpu_custom_call.1} parent=35 // pred_check
          %p342 = pneg %p57
        $region38: #{tpu_custom_call.1} parent=35 // pred_check_branch
          %344 = sbr.rel (%p342) target = $region40
        $region39: #{tpu_custom_call.1} parent=35 // pred_region
          %s345 = smul.u32 2, %s31
          %p346 = scmp.lt.s32.totalorder %s30, 1
          %s347 = scalar_select %p346, %s30, 1
          %p348 = scmp.lt.s32.totalorder %s345, 1
          %s349 = scalar_select %p348, %s345, 1
          %s350 = smul.addr %s347, 8
          %s351 = sadd.s32 %s349, %s350
          %s352 = smul.addr %s351, 8
          %s353 = scalar_lea.vmem %s0, %s352
          %s354 = smul.u32 2, %s31
        $region40: #{tpu_custom_call.1} parent=35 // pred_fallthru
          _
        // Predicated region
        $region41: #{tpu_custom_call.1} parent=35 // pred_check
          %p355 = pneg %p85
        $region42: #{tpu_custom_call.1} parent=35 // pred_check_branch
          %357 = sbr.rel (%p355) target = $region44
        $region43: #{tpu_custom_call.1} parent=35 // pred_region
          %s358 = sand.u32 %s75, 1
          %s359 = scalar_lea.sflag [#allocation3], %s358
          %s360 = sand.u32 %s75, 1
          %s361 = smul.addr %s360, 64
          %s362 = scalar_lea.vmem [#allocation2], %s361
          %s363 = smul.u32 2, %s31
          %s365 = ssub.s32 1024, 1024
          %366 = vsyncadd %s359, %s365
          %s367 = smul.addr %s30, 8
          %s368 = sadd.s32 %s363, %s367
          %s369 = smul.addr %s368, 128
          %s370 = scalar_lea.hbm %s1, %s369
          %s371 = sshll.u32 %s362, 4
          %s372 = int_to_ptr.vmem [resolvable:$true] %s371
          %377 = dma.hbm_to_vmem [thread:$0]  %s370, 1024, %s372, %s359, 256, 256, 16
        $region44: #{tpu_custom_call.1} parent=35 // pred_fallthru
          _
      $region36: #{tpu_custom_call.1} parent=5 // pred_fallthru
        _
      %p378 = scmp.le.s32.totalorder 1, %s23
      %p379 = scmp.lt.s32.totalorder %s23, 3
      %p380 = pnand %p378, %p379
      %p381 = pneg %p380
      // Predicated region
      $region45: #{tpu_custom_call.1} parent=5 // pred_check
        _
      $region46: #{tpu_custom_call.1} parent=5 // pred_check_branch
        %383 = sbr.rel (%p380) target = $region48
      $region47: #{tpu_custom_call.1} parent=5 // pred_region
        %s384 = ssub.s32 %s23, 1
        %s385 = sand.u32 %s78, 1
        %s386 = scalar_lea.sflag [#allocation3], %s385
        %s387 = sand.u32 %s78, 1
        %s388 = smul.addr %s387, 64
        %s389 = scalar_lea.vmem [#allocation2], %s388
        // Predicated region
        $region49: #{tpu_custom_call.1} parent=47 // pred_check
          %p390 = pneg %p91
        $region50: #{tpu_custom_call.1} parent=47 // pred_check_branch
          %392 = sbr.rel (%p390) target = $region52
        $region51: #{tpu_custom_call.1} parent=47 // pred_region
          %393 = dma.done %s386, 1024
        $region52: #{tpu_custom_call.1} parent=47 // pred_fallthru
          _
        %s394 = smul.u32 2, %s33
        %p395 = scmp.lt.s32.totalorder %s32, 1
        %s396 = scalar_select %p395, %s32, 1
        %p397 = scmp.lt.s32.totalorder %s394, 1
        %s398 = scalar_select %p397, %s394, 1
        %s399 = smul.addr %s396, 8
        %s400 = sadd.s32 %s398, %s399
        %s401 = smul.addr %s400, 8
        %s402 = scalar_lea.vmem %s0, %s401
        %p403 = pneg %p63
        %p404 = pneg %p60
        %s405 = sand.u32 %s78, 1
        %s406 = scalar_lea.sflag [#allocation3], %s405
        %s407 = sand.u32 %s78, 1
        %s408 = smul.addr %s407, 64
        %s409 = scalar_lea.vmem [#allocation2], %s408
        %p410 = pneg %p91
        %p411 = pneg %p88
        %p412 = pneg %p112
        %p413 = pneg %p109
        %p414 = pneg %p133
        %p415 = pneg %p130
        %p416 = pneg %p154
        %p417 = pneg %p151
        %p418 = pneg %p175
        %p419 = pneg %p172
        %p420 = pneg %p196
        %p421 = pneg %p193
        %p422 = pneg %p224
        %p423 = pneg %p221
        %s424 = sand.u32 %s211, 1
        %s425 = scalar_lea.sflag [#allocation4], %s424
        %s426 = sand.u32 %s211, 1
        %s427 = smul.addr %s426, 2
        %s428 = scalar_lea.vmem [#allocation5], %s427
        %p429 = pneg %p252
        %p430 = pneg %p249
        %s431 = smul.u32 32, %s33
        %p432 = scmp.lt.s32.totalorder %s32, 1
        %s433 = scalar_select %p432, %s32, 1
        %p434 = scmp.lt.s32.totalorder %s431, 31
        %s435 = scalar_select %p434, %s431, 31
        %s436 = smul.addr %s433, 32
        %s437 = sadd.s32 %s435, %s436
        %s438 = smul.addr %s437, 8
        %s439 = scalar_lea.vmem %s8, %s438
        %p440 = pneg %p280
        %p441 = pneg %p277
        %s442 = smul.u32 32, %s33
        %p443 = scmp.lt.s32.totalorder %s32, 1
        %s444 = scalar_select %p443, %s32, 1
        %p445 = scmp.lt.s32.totalorder %s442, 31
        %s446 = scalar_select %p445, %s442, 31
        %s447 = smul.addr %s444, 32
        %s448 = sadd.s32 %s446, %s447
        %s449 = smul.addr %s448, 8
        %s450 = scalar_lea.vmem %s9, %s449
        %p451 = pneg %p308
        %p452 = pneg %p305
        %s453 = smul.u32 32, %s33
        %p454 = scmp.lt.s32.totalorder %s32, 1
        %s455 = scalar_select %p454, %s32, 1
        %p456 = scmp.lt.s32.totalorder %s453, 31
        %s457 = scalar_select %p456, %s453, 31
        %s458 = smul.addr %s455, 32
        %s459 = sadd.s32 %s457, %s458
        %s460 = smul.addr %s459, 8
        %s461 = scalar_lea.vmem %s10, %s460
        %s462 = smul.u32 2, %s33
        %p463 = scmp.lt.s32.totalorder %s32, 1
        %s464 = scalar_select %p463, %s32, 1
        %p465 = scmp.lt.s32.totalorder %s462, 1
        %s466 = scalar_select %p465, %s462, 1
        %s467 = smul.addr %s464, 8
        %s468 = sadd.s32 %s466, %s467
        %s469 = smul.addr %s468, 8
        %s470 = scalar_lea.vmem %s0, %s469
        %s471 = smul.u32 2, %s33
        %s472 = smul.u32 2, %s33
        %s473 = smul.u32 2, %s33
        %s474 = smul.u32 32, %s33
        %p475 = scmp.lt.s32.totalorder %s32, 1
        %s476 = scalar_select %p475, %s32, 1
        %p477 = scmp.lt.s32.totalorder %s474, 31
        %s478 = scalar_select %p477, %s474, 31
        %s479 = smul.addr %s476, 32
        %s480 = sadd.s32 %s478, %s479
        %s481 = smul.addr %s480, 8
        %s482 = scalar_lea.vmem %s8, %s481
        %s483 = smul.u32 32, %s33
        %s484 = smul.u32 32, %s33
        %p485 = scmp.lt.s32.totalorder %s32, 1
        %s486 = scalar_select %p485, %s32, 1
        %p487 = scmp.lt.s32.totalorder %s484, 31
        %s488 = scalar_select %p487, %s484, 31
        %s489 = smul.addr %s486, 32
        %s490 = sadd.s32 %s488, %s489
        %s491 = smul.addr %s490, 8
        %s492 = scalar_lea.vmem %s9, %s491
        %s493 = smul.u32 32, %s33
        %s494 = smul.u32 32, %s33
        %p495 = scmp.lt.s32.totalorder %s32, 1
        %s496 = scalar_select %p495, %s32, 1
        %p497 = scmp.lt.s32.totalorder %s494, 31
        %s498 = scalar_select %p497, %s494, 31
        %s499 = smul.addr %s496, 32
        %s500 = sadd.s32 %s498, %s499
        %s501 = smul.addr %s500, 8
        %s502 = scalar_lea.vmem %s10, %s501
        %s503 = smul.u32 32, %s33
        %v504 = vld [vmem:[%s470] sm:$0xff]
        %v505 = vld [vmem:[%s470 + $0x8] sm:$0xff]
        %v506 = vld [vmem:[%s470 + $0x10] sm:$0xff]
        %v507 = vld [vmem:[%s470 + $0x18] sm:$0xff]
        %v508 = vld [vmem:[%s470 + $0x20] sm:$0xff]
        %v509 = vld [vmem:[%s470 + $0x28] sm:$0xff]
        %v510 = vld [vmem:[%s470 + $0x30] sm:$0xff]
        %v511 = vld [vmem:[%s470 + $0x38] sm:$0xff]
        %v512 = vld [vmem:[%s389] sm:$0xff]
        %v513 = vld [vmem:[%s389 + $0x8] sm:$0xff]
        %v514 = vld [vmem:[%s389 + $0x10] sm:$0xff]
        %v515 = vld [vmem:[%s389 + $0x18] sm:$0xff]
        %v516 = vld [vmem:[%s389 + $0x20] sm:$0xff]
        %v517 = vld [vmem:[%s389 + $0x28] sm:$0xff]
        %v518 = vld [vmem:[%s389 + $0x30] sm:$0xff]
        %v519 = vld [vmem:[%s389 + $0x38] sm:$0xff]
        %v520 = vld [vmem:[%s4] sm:$0xff]
        %v521 = vld [vmem:[%s4 + $0x8] sm:$0xff]
        %v522 = vld [vmem:[%s4 + $0x10] sm:$0xff]
        %v523 = vld [vmem:[%s4 + $0x18] sm:$0xff]
        %v524 = vld [vmem:[%s4 + $0x20] sm:$0xff]
        %v525 = vld [vmem:[%s4 + $0x28] sm:$0xff]
        %v526 = vld [vmem:[%s4 + $0x30] sm:$0xff]
        %v527 = vld [vmem:[%s4 + $0x38] sm:$0xff]
        %v528 = vld [vmem:[%s4 + $0x40] sm:$0x1]
        %v529 = vld [vmem:[%s5] sm:$0xff]
        %v530 = vld [vmem:[%s5 + $0x8] sm:$0xff]
        %v531 = vld [vmem:[%s5 + $0x10] sm:$0xff]
        %v532 = vld [vmem:[%s5 + $0x18] sm:$0xff]
        %v533 = vld [vmem:[%s5 + $0x20] sm:$0xff]
        %v534 = vld [vmem:[%s5 + $0x28] sm:$0xff]
        %v535 = vld [vmem:[%s5 + $0x30] sm:$0xff]
        %v536 = vld [vmem:[%s5 + $0x38] sm:$0xff]
        %v537 = vld [vmem:[%s5 + $0x40] sm:$0x1]
        %539 = vset.pattern.permute.xlu0 0
        %540 = vperm.xlu0 %539, %v529
        %v541 = vpop.permute.xlu0 %540
        %544 = vset.pattern.permute.xlu0 0
        %545 = vperm.xlu0 %544, %v530
        %v546 = vpop.permute.xlu0 %545
        %549 = vset.pattern.permute.xlu0 0
        %550 = vperm.xlu0 %549, %v531
        %v551 = vpop.permute.xlu0 %550
        %554 = vset.pattern.permute.xlu0 0
        %555 = vperm.xlu0 %554, %v532
        %v556 = vpop.permute.xlu0 %555
        %559 = vset.pattern.permute.xlu0 0
        %560 = vperm.xlu0 %559, %v533
        %v561 = vpop.permute.xlu0 %560
        %564 = vset.pattern.permute.xlu0 0
        %565 = vperm.xlu0 %564, %v534
        %v566 = vpop.permute.xlu0 %565
        %569 = vset.pattern.permute.xlu0 0
        %570 = vperm.xlu0 %569, %v535
        %v571 = vpop.permute.xlu0 %570
        %574 = vset.pattern.permute.xlu0 0
        %575 = vperm.xlu0 %574, %v536
        %v576 = vpop.permute.xlu0 %575
        %579 = vset.pattern.permute.xlu0 0
        %580 = vperm.xlu0 %579, %v537
        %v581 = vpop.permute.xlu0 %580
        %vm583 = vcmask 261120
        %v585 = vsel %vm583, %v520, 0
        %v588 = vsel %vm583, %v521, 0
        %v591 = vsel %vm583, %v522, 0
        %v594 = vsel %vm583, %v523, 0
        %v597 = vsel %vm583, %v524, 0
        %v600 = vsel %vm583, %v525, 0
        %v603 = vsel %vm583, %v526, 0
        %v606 = vsel %vm583, %v527, 0
        %v609 = vsel %vm583, %v528, 0
        %611 = vmatprep.subr.mxu0 %v513
        %612 = vmatpush1.msra.mxu0 %v512
        %613 = vmatprep.subr.mxu0 %v515
        %614 = vmatpush1.msra.mxu0 %v514
        %615 = vmatprep.subr.mxu0 %v517
        %616 = vmatpush1.msra.mxu0 %v516
        %617 = vmatprep.subr.mxu0 %v519
        %618 = vmatpush1.msra.mxu0 %v518
        %619 = vmatprep.subr.mxu0 0.0
        %620 = vmatpush1.msra.mxu0 0.0
        %621 = vmatprep.subr.mxu0 0.0
        %622 = vmatpush1.msra.mxu0 0.0
        %623 = vmatprep.subr.mxu0 0.0
        %624 = vmatpush1.msra.mxu0 0.0
        %625 = vmatprep.subr.mxu0 0.0
        %626 = vmatpush1.msra.mxu0 0.0
        %627 = vmatprep.subr.mxu0 0.0
        %628 = vmatpush1.msra.mxu0 0.0
        %629 = vmatprep.subr.mxu0 0.0
        %630 = vmatpush1.msra.mxu0 0.0
        %631 = vmatprep.subr.mxu0 0.0
        %632 = vmatpush1.msra.mxu0 0.0
        %633 = vmatprep.subr.mxu0 0.0
        %634 = vmatpush1.msra.mxu0 0.0
        %635 = vmatprep.subr.mxu0 0.0
        %636 = vmatpush1.msra.mxu0 0.0
        %637 = vmatprep.subr.mxu0 0.0
        %638 = vmatpush1.msra.mxu0 0.0
        %639 = vmatprep.subr.mxu0 0.0
        %640 = vmatpush1.msra.mxu0 0.0
        %641 = vmatprep.subr.mxu0 0.0
        %642 = vmatpush1.msra.mxu0 0.0
        %643 = vmatprep.subr.mxu0 0.0
        %644 = vmatpush1.msra.mxu0 0.0
        %645 = vmatprep.subr.mxu0 0.0
        %646 = vmatpush1.msra.mxu0 0.0
        %647 = vmatprep.subr.mxu0 0.0
        %648 = vmatpush1.msra.mxu0 0.0
        %649 = vmatprep.subr.mxu0 0.0
        %650 = vmatpush1.msra.mxu0 0.0
        %651 = vmatprep.subr.mxu0 0.0
        %652 = vmatpush1.msra.mxu0 0.0
        %653 = vmatprep.subr.mxu0 0.0
        %654 = vmatpush1.msra.mxu0 0.0
        %655 = vmatprep.subr.mxu0 0.0
        %656 = vmatpush1.msra.mxu0 0.0
        %657 = vmatprep.subr.mxu0 0.0
        %658 = vmatpush1.msra.mxu0 0.0
        %659 = vmatprep.subr.mxu0 0.0
        %660 = vmatpush1.msra.mxu0 0.0
        %661 = vmatprep.subr.mxu0 0.0
        %662 = vmatpush1.msra.mxu0 0.0
        %663 = vmatprep.subr.mxu0 0.0
        %664 = vmatpush1.msra.mxu0 0.0
        %665 = vmatprep.subr.mxu0 0.0
        %666 = vmatpush1.msra.mxu0 0.0
        %667 = vmatprep.subr.mxu0 0.0
        %668 = vmatpush1.msra.mxu0 0.0
        %669 = vmatprep.subr.mxu0 0.0
        %670 = vmatpush1.msra.mxu0 0.0
        %671 = vmatprep.subr.mxu0 0.0
        %672 = vmatpush1.msra.mxu0 0.0
        %673 = vmatprep.subr.mxu0 0.0
        %674 = vmatpush1.msra.mxu0 0.0
        %675 = vmatprep.mubr.f32.mxu0 0.0
        %676 = vmatmul.mubr.f32.gmra.mrb[0].mxu0 %v585
        %v677 = vpop.f32.mrb[0].mxu0
        %v678 = vadd.f32 %v541, %v677
        %v679 = vpop.f32.mrb[0].mxu0
        %v680 = vadd.f32 %v541, %v679
        %681 = vmatprep.mubr.f32.mxu0 0.0
        %682 = vmatmul.mubr.f32.gmra.mrb[0].mxu0 %v588
        %v683 = vpop.f32.mrb[0].mxu0
        %v684 = vadd.f32 %v546, %v683
        %v685 = vpop.f32.mrb[0].mxu0
        %v686 = vadd.f32 %v546, %v685
        %687 = vmatprep.mubr.f32.mxu0 0.0
        %688 = vmatmul.mubr.f32.gmra.mrb[0].mxu0 %v591
        %v689 = vpop.f32.mrb[0].mxu0
        %v690 = vadd.f32 %v551, %v689
        %v691 = vpop.f32.mrb[0].mxu0
        %v692 = vadd.f32 %v551, %v691
        %693 = vmatprep.mubr.f32.mxu0 0.0
        %694 = vmatmul.mubr.f32.gmra.mrb[0].mxu0 %v594
        %v695 = vpop.f32.mrb[0].mxu0
        %v696 = vadd.f32 %v556, %v695
        %v697 = vpop.f32.mrb[0].mxu0
        %v698 = vadd.f32 %v556, %v697
        %699 = vmatprep.mubr.f32.mxu0 0.0
        %700 = vmatmul.mubr.f32.gmra.mrb[0].mxu0 %v597
        %v701 = vpop.f32.mrb[0].mxu0
        %v702 = vadd.f32 %v561, %v701
        %v703 = vpop.f32.mrb[0].mxu0
        %v704 = vadd.f32 %v561, %v703
        %705 = vmatprep.mubr.f32.mxu0 0.0
        %706 = vmatmul.mubr.f32.gmra.mrb[0].mxu0 %v600
        %v707 = vpop.f32.mrb[0].mxu0
        %v708 = vadd.f32 %v566, %v707
        %v709 = vpop.f32.mrb[0].mxu0
        %v710 = vadd.f32 %v566, %v709
        %711 = vmatprep.mubr.f32.mxu0 0.0
        %712 = vmatmul.mubr.f32.gmra.mrb[0].mxu0 %v603
        %v713 = vpop.f32.mrb[0].mxu0
        %v714 = vadd.f32 %v571, %v713
        %v715 = vpop.f32.mrb[0].mxu0
        %v716 = vadd.f32 %v571, %v715
        %717 = vmatprep.mubr.f32.mxu0 0.0
        %718 = vmatmul.mubr.f32.gmra.mrb[0].mxu0 %v606
        %v719 = vpop.f32.mrb[0].mxu0
        %v720 = vadd.f32 %v576, %v719
        %v721 = vpop.f32.mrb[0].mxu0
        %v722 = vadd.f32 %v576, %v721
        %723 = vmatprep.mubr.f32.mxu0 0.0
        %724 = vmatmul.mubr.f32.gmra.mrb[0].mxu0 %v609
        %v725 = vpop.f32.mrb[0].mxu0
        %v726 = vadd.f32 %v581, %v725
        %v727 = vpop.f32.mrb[0].mxu0
        %v728 = vadd.f32 %v581, %v727
        %729 = vdwg.mxu0
        %v730 = vld [vmem:[%s2] sm:$0xff]
        %v731 = vld [vmem:[%s3] sm:$0xff]
        %733 = vset.pattern.permute.xlu0 0
        %734 = vperm.xlu0 %733, %v731
        %v735 = vpop.permute.xlu0 %734
        %v738 = vsel %vm583, %v730, 0
        %740 = vmatprep.subr.mxu0 %v505
        %741 = vmatpush1.msra.mxu0 %v504
        %742 = vmatprep.subr.mxu0 %v507
        %743 = vmatpush1.msra.mxu0 %v506
        %744 = vmatprep.subr.mxu0 %v509
        %745 = vmatpush1.msra.mxu0 %v508
        %746 = vmatprep.subr.mxu0 %v511
        %747 = vmatpush1.msra.mxu0 %v510
        %748 = vmatprep.subr.mxu0 0.0
        %749 = vmatpush1.msra.mxu0 0.0
        %750 = vmatprep.subr.mxu0 0.0
        %751 = vmatpush1.msra.mxu0 0.0
        %752 = vmatprep.subr.mxu0 0.0
        %753 = vmatpush1.msra.mxu0 0.0
        %754 = vmatprep.subr.mxu0 0.0
        %755 = vmatpush1.msra.mxu0 0.0
        %756 = vmatprep.subr.mxu0 0.0
        %757 = vmatpush1.msra.mxu0 0.0
        %758 = vmatprep.subr.mxu0 0.0
        %759 = vmatpush1.msra.mxu0 0.0
        %760 = vmatprep.subr.mxu0 0.0
        %761 = vmatpush1.msra.mxu0 0.0
        %762 = vmatprep.subr.mxu0 0.0
        %763 = vmatpush1.msra.mxu0 0.0
        %764 = vmatprep.subr.mxu0 0.0
        %765 = vmatpush1.msra.mxu0 0.0
        %766 = vmatprep.subr.mxu0 0.0
        %767 = vmatpush1.msra.mxu0 0.0
        %768 = vmatprep.subr.mxu0 0.0
        %769 = vmatpush1.msra.mxu0 0.0
        %770 = vmatprep.subr.mxu0 0.0
        %771 = vmatpush1.msra.mxu0 0.0
        %772 = vmatprep.subr.mxu0 0.0
        %773 = vmatpush1.msra.mxu0 0.0
        %774 = vmatprep.subr.mxu0 0.0
        %775 = vmatpush1.msra.mxu0 0.0
        %776 = vmatprep.subr.mxu0 0.0
        %777 = vmatpush1.msra.mxu0 0.0
        %778 = vmatprep.subr.mxu0 0.0
        %779 = vmatpush1.msra.mxu0 0.0
        %780 = vmatprep.subr.mxu0 0.0
        %781 = vmatpush1.msra.mxu0 0.0
        %782 = vmatprep.subr.mxu0 0.0
        %783 = vmatpush1.msra.mxu0 0.0
        %784 = vmatprep.subr.mxu0 0.0
        %785 = vmatpush1.msra.mxu0 0.0
        %786 = vmatprep.subr.mxu0 0.0
        %787 = vmatpush1.msra.mxu0 0.0
        %788 = vmatprep.subr.mxu0 0.0
        %789 = vmatpush1.msra.mxu0 0.0
        %790 = vmatprep.subr.mxu0 0.0
        %791 = vmatpush1.msra.mxu0 0.0
        %792 = vmatprep.subr.mxu0 0.0
        %793 = vmatpush1.msra.mxu0 0.0
        %794 = vmatprep.subr.mxu0 0.0
        %795 = vmatpush1.msra.mxu0 0.0
        %796 = vmatprep.subr.mxu0 0.0
        %797 = vmatpush1.msra.mxu0 0.0
        %798 = vmatprep.subr.mxu0 0.0
        %799 = vmatpush1.msra.mxu0 0.0
        %800 = vmatprep.subr.mxu0 0.0
        %801 = vmatpush1.msra.mxu0 0.0
        %802 = vmatprep.subr.mxu0 0.0
        %803 = vmatpush1.msra.mxu0 0.0
        %804 = vmatprep.mubr.f32.mxu0 0.0
        %805 = vmatmul.mubr.f32.gmra.mrb[0].mxu0 %v738
        %v806 = vpop.f32.mrb[0].mxu0
        %v807 = vadd.f32 %v735, %v806
        %v808 = vpop.f32.mrb[0].mxu0
        %v809 = vadd.f32 %v735, %v808
        %810 = vdwg.mxu0
        %v813 = vcombine.low %v726, %v728
        %v815 = vunpack.c.l.s4 1966171168
        %v816 = vunpack.c.0.s8 %v815
        %v817 = vlaneseq
        %v818 = vshrl.u32 %v817, 7
        %v819 = vsub.s32 %v816, %v818
        %v820 = vrot.slane %v813, %v819
        %v822 = vunpack.c.l.s4 1966171168
        %v823 = vunpack.c.0.s8 %v822
        %v824 = vlaneseq
        %v825 = vshrl.u32 %v824, 7
        %v826 = vsub.s32 %v823, %v825
        %v827 = vrot.slane %v820, %v826
        %v829 = vlaneseq
        %vm830 = vcmp.ge.s32.totalorder %v829, 0
        %vm831 = vcmp.lt.s32.totalorder %v829, 256
        %vm832 = vmand %vm830, %vm831
        %833 = vst.msk [vmem:[%s428] sm:$0x3] %vm832, %v827
        %v834 = vmax.f32 %v678, %v684
        %v835 = vrot.slane %v834, 4
        %v836 = vmax.f32 %v834, %v835
        %v837 = vrot.slane %v836, 2
        %v838 = vmax.f32 %v836, %v837
        %v839 = vrot.slane %v838, 1
        %v840 = vmax.f32 %v838, %v839
        %v841 = vmax.f32 %v680, %v686
        %v842 = vrot.slane %v841, 4
        %v843 = vmax.f32 %v841, %v842
        %v844 = vrot.slane %v843, 2
        %v845 = vmax.f32 %v843, %v844
        %v846 = vrot.slane %v845, 1
        %v847 = vmax.f32 %v845, %v846
        %v848 = vsub.f32 %v678, %v840
        %v849 = vsub.f32 %v680, %v847
        %v850 = vsub.f32 %v684, %v840
        %v851 = vsub.f32 %v686, %v847
        %v852 = vmul.f32 %v848, 1.442695
        %v853 = vpow.pop %v852
        %v854 = vmul.f32 %v849, 1.442695
        %v855 = vpow.pop %v854
        %v856 = vmul.f32 %v850, 1.442695
        %v857 = vpow.pop %v856
        %v858 = vmul.f32 %v851, 1.442695
        %v859 = vpow.pop %v858
        %v860 = vmax.f32 %v690, %v696
        %v861 = vrot.slane %v860, 4
        %v862 = vmax.f32 %v860, %v861
        %v863 = vrot.slane %v862, 2
        %v864 = vmax.f32 %v862, %v863
        %v865 = vrot.slane %v864, 1
        %v866 = vmax.f32 %v864, %v865
        %v867 = vmax.f32 %v692, %v698
        %v868 = vrot.slane %v867, 4
        %v869 = vmax.f32 %v867, %v868
        %v870 = vrot.slane %v869, 2
        %v871 = vmax.f32 %v869, %v870
        %v872 = vrot.slane %v871, 1
        %v873 = vmax.f32 %v871, %v872
        %v874 = vsub.f32 %v690, %v866
        %v875 = vsub.f32 %v692, %v873
        %v876 = vsub.f32 %v696, %v866
        %v877 = vsub.f32 %v698, %v873
        %v878 = vmul.f32 %v874, 1.442695
        %v879 = vpow.pop %v878
        %v880 = vmul.f32 %v875, 1.442695
        %v881 = vpow.pop %v880
        %v882 = vmul.f32 %v876, 1.442695
        %v883 = vpow.pop %v882
        %v884 = vmul.f32 %v877, 1.442695
        %v885 = vpow.pop %v884
        %v886 = vmax.f32 %v702, %v708
        %v887 = vrot.slane %v886, 4
        %v888 = vmax.f32 %v886, %v887
        %v889 = vrot.slane %v888, 2
        %v890 = vmax.f32 %v888, %v889
        %v891 = vrot.slane %v890, 1
        %v892 = vmax.f32 %v890, %v891
        %v893 = vmax.f32 %v704, %v710
        %v894 = vrot.slane %v893, 4
        %v895 = vmax.f32 %v893, %v894
        %v896 = vrot.slane %v895, 2
        %v897 = vmax.f32 %v895, %v896
        %v898 = vrot.slane %v897, 1
        %v899 = vmax.f32 %v897, %v898
        %v900 = vsub.f32 %v702, %v892
        %v901 = vsub.f32 %v704, %v899
        %v902 = vsub.f32 %v708, %v892
        %v903 = vsub.f32 %v710, %v899
        %v904 = vmul.f32 %v900, 1.442695
        %v905 = vpow.pop %v904
        %v906 = vmul.f32 %v901, 1.442695
        %v907 = vpow.pop %v906
        %v908 = vmul.f32 %v902, 1.442695
        %v909 = vpow.pop %v908
        %v910 = vmul.f32 %v903, 1.442695
        %v911 = vpow.pop %v910
        %v912 = vmax.f32 %v714, %v720
        %v913 = vrot.slane %v912, 4
        %v914 = vmax.f32 %v912, %v913
        %v915 = vrot.slane %v914, 2
        %v916 = vmax.f32 %v914, %v915
        %v917 = vrot.slane %v916, 1
        %v918 = vmax.f32 %v916, %v917
        %v919 = vmax.f32 %v716, %v722
        %v920 = vrot.slane %v919, 4
        %v921 = vmax.f32 %v919, %v920
        %v922 = vrot.slane %v921, 2
        %v923 = vmax.f32 %v921, %v922
        %v924 = vrot.slane %v923, 1
        %v925 = vmax.f32 %v923, %v924
        %v926 = vsub.f32 %v714, %v918
        %v927 = vsub.f32 %v716, %v925
        %v928 = vsub.f32 %v720, %v918
        %v929 = vsub.f32 %v722, %v925
        %v930 = vmul.f32 %v926, 1.442695
        %v931 = vpow.pop %v930
        %v932 = vmul.f32 %v927, 1.442695
        %v933 = vpow.pop %v932
        %v934 = vmul.f32 %v928, 1.442695
        %v935 = vpow.pop %v934
        %v936 = vmul.f32 %v929, 1.442695
        %v937 = vpow.pop %v936
        %v938 = vld [vmem:[%s6] sm:$0xff]
        %vm939 = vcmask 523264
        %v941 = vsel %vm939, %v938, 0
        %943 = vmatprep.subr.mxu0 %v855
        %944 = vmatpush1.msra.mxu0 %v853
        %945 = vmatprep.subr.mxu0 %v859
        %946 = vmatpush1.msra.mxu0 %v857
        %947 = vmatprep.subr.mxu0 %v881
        %948 = vmatpush1.msra.mxu0 %v879
        %949 = vmatprep.subr.mxu0 %v885
        %950 = vmatpush1.msra.mxu0 %v883
        %951 = vmatprep.subr.mxu0 %v907
        %952 = vmatpush1.msra.mxu0 %v905
        %953 = vmatprep.subr.mxu0 %v911
        %954 = vmatpush1.msra.mxu0 %v909
        %955 = vmatprep.subr.mxu0 %v933
        %956 = vmatpush1.msra.mxu0 %v931
        %957 = vmatprep.subr.mxu0 %v937
        %958 = vmatpush1.msra.mxu0 %v935
        %959 = vmatprep.subr.mxu0 0.0
        %960 = vmatpush1.msra.mxu0 0.0
        %961 = vmatprep.subr.mxu0 0.0
        %962 = vmatpush1.msra.mxu0 0.0
        %963 = vmatprep.subr.mxu0 0.0
        %964 = vmatpush1.msra.mxu0 0.0
        %965 = vmatprep.subr.mxu0 0.0
        %966 = vmatpush1.msra.mxu0 0.0
        %967 = vmatprep.subr.mxu0 0.0
        %968 = vmatpush1.msra.mxu0 0.0
        %969 = vmatprep.subr.mxu0 0.0
        %970 = vmatpush1.msra.mxu0 0.0
        %971 = vmatprep.subr.mxu0 0.0
        %972 = vmatpush1.msra.mxu0 0.0
        %973 = vmatprep.subr.mxu0 0.0
        %974 = vmatpush1.msra.mxu0 0.0
        %975 = vmatprep.subr.mxu0 0.0
        %976 = vmatpush1.msra.mxu0 0.0
        %977 = vmatprep.subr.mxu0 0.0
        %978 = vmatpush1.msra.mxu0 0.0
        %979 = vmatprep.subr.mxu0 0.0
        %980 = vmatpush1.msra.mxu0 0.0
        %981 = vmatprep.subr.mxu0 0.0
        %982 = vmatpush1.msra.mxu0 0.0
        %983 = vmatprep.subr.mxu0 0.0
        %984 = vmatpush1.msra.mxu0 0.0
        %985 = vmatprep.subr.mxu0 0.0
        %986 = vmatpush1.msra.mxu0 0.0
        %987 = vmatprep.subr.mxu0 0.0
        %988 = vmatpush1.msra.mxu0 0.0
        %989 = vmatprep.subr.mxu0 0.0
        %990 = vmatpush1.msra.mxu0 0.0
        %991 = vmatprep.subr.mxu0 0.0
        %992 = vmatpush1.msra.mxu0 0.0
        %993 = vmatprep.subr.mxu0 0.0
        %994 = vmatpush1.msra.mxu0 0.0
        %995 = vmatprep.subr.mxu0 0.0
        %996 = vmatpush1.msra.mxu0 0.0
        %997 = vmatprep.subr.mxu0 0.0
        %998 = vmatpush1.msra.mxu0 0.0
        %999 = vmatprep.subr.mxu0 0.0
        %1000 = vmatpush1.msra.mxu0 0.0
        %1001 = vmatprep.subr.mxu0 0.0
        %1002 = vmatpush1.msra.mxu0 0.0
        %1003 = vmatprep.subr.mxu0 0.0
        %1004 = vmatpush1.msra.mxu0 0.0
        %1005 = vmatprep.subr.mxu0 0.0
        %1006 = vmatpush1.msra.mxu0 0.0
        %1007 = vmatprep.mubr.f32.mxu0 0.0
        %1008 = vmatmul.mubr.f32.gmra.mrb[0].mxu0 %v941
        %v1009 = vpop.f32.mrb[0].mxu0
        %v1010 = vadd.f32 0.0, %v1009
        %v1011 = vpop.f32.mrb[0].mxu0
        %v1012 = vadd.f32 0.0, %v1011
        %1013 = vdwg.mxu0
        %v1016 = vrot.slane %v1010, 4
        %v1017 = vrot.slane %v1012, 4
        %v1020 = vrcp.pop %v1016
        %v1021 = vmul.f32 %v1010, %v1020
        %v1022 = vrcp.pop %v1017
        %v1023 = vmul.f32 %v1012, %v1022
        %v1024 = vlaneseq
        %v1025 = vand.u32 %v1024, 127
        %v1026 = vadd.s32 %v1025, 128
        %s1027 = smul.u32 %s33, 256
        %v1028 = vstv %s1027
        %v1029 = vadd.s32 %v1025, %v1028
        %v1030 = vadd.s32 %v1026, %v1028
        %v1031 = vcvt.s32.f32 %v1029
        %v1032 = vcvt.s32.f32 %v1030
        %v1033 = vrcp.pop 16.0
        %v1034 = vmul.f32 %v1031, %v1033
        %v1035 = vmul.f32 %v1032, %v1033
        %v1036 = vfloor.f32 %v1034
        %v1037 = vfloor.f32 %v1035
        %v1038 = vmul.f32 %v1036, 16.0
        %v1039 = vmul.f32 %v1037, 16.0
        %v1040 = vsub.f32 %v1031, %v1038
        %v1041 = vsub.f32 %v1032, %v1039
        %v1042 = vadd.f32 %v1040, 0.5
        %v1043 = vadd.f32 %v1041, 0.5
        %v1044 = vmul.f32 %v1042, 8.0
        %v1045 = vmul.f32 %v1043, 8.0
        %v1046 = vadd.f32 %v1036, 0.5
        %v1047 = vadd.f32 %v1037, 0.5
        %v1048 = vmul.f32 %v1046, 8.0
        %v1049 = vmul.f32 %v1047, 8.0
        %vm1050 = vcmask 1040384
        %v1051 = vsel %vm1050, %v1044, %v1048
        %v1052 = vsel %vm1050, %v1045, %v1049
        %vm1053 = vcmask 1041408
        %v1054 = vsel %vm1053, %v1051, %v1044
        %v1055 = vsel %vm1053, %v1052, %v1045
        %vm1056 = vcmask 1042432
        %v1057 = vsel %vm1056, %v1054, %v1048
        %v1058 = vsel %vm1056, %v1055, %v1049
        %v1059 = vmul.f32 %v1021, 8.0
        %v1060 = vmul.f32 %v1023, 8.0
        %v1061 = vadd.f32 %v1057, %v1059
        %v1062 = vadd.f32 %v1058, %v1060
        %1063 = vxpose.xlu0.b32.start [1/16] %v678, 128
        %1064 = vxpose.xlu0.b32.cont [2/16] %v684, 128
        %1065 = vxpose.xlu0.b32.cont [3/16] %v690, 128
        %1066 = vxpose.xlu0.b32.cont [4/16] %v696, 128
        %1067 = vxpose.xlu0.b32.cont [5/16] %v702, 128
        %1068 = vxpose.xlu0.b32.cont [6/16] %v708, 128
        %1069 = vxpose.xlu0.b32.cont [7/16] %v714, 128
        %1070 = vxpose.xlu0.b32.cont [8/16] %v720, 128
        %1071 = vxpose.xlu0.b32.cont [9/16] 0.0, 128
        %1072 = vxpose.xlu0.b32.cont [10/16] 0.0, 128
        %1073 = vxpose.xlu0.b32.cont [11/16] 0.0, 128
        %1074 = vxpose.xlu0.b32.cont [12/16] 0.0, 128
        %1075 = vxpose.xlu0.b32.cont [13/16] 0.0, 128
        %1076 = vxpose.xlu0.b32.cont [14/16] 0.0, 128
        %1077 = vxpose.xlu0.b32.cont [15/16] 0.0, 128
        %1078 = vxpose.xlu0.b32.end [16/16] 0.0, 128
        %v1079 = vpop.trf.xlu0
        %v1080 = vpop.trf.xlu0
        %v1081 = vpop.trf.xlu0
        %v1082 = vpop.trf.xlu0
        %v1083 = vpop.trf.xlu0
        %v1084 = vpop.trf.xlu0
        %v1085 = vpop.trf.xlu0
        %v1086 = vpop.trf.xlu0
        %v1087 = vpop.trf.xlu0
        %v1088 = vpop.trf.xlu0
        %v1089 = vpop.trf.xlu0
        %v1090 = vpop.trf.xlu0
        %v1091 = vpop.trf.xlu0
        %v1092 = vpop.trf.xlu0
        %v1093 = vpop.trf.xlu0
        %v1094 = vpop.trf.xlu0
        %1095 = vxpose.xlu0.b32.start [1/16] %v680, 128
        %1096 = vxpose.xlu0.b32.cont [2/16] %v686, 128
        %1097 = vxpose.xlu0.b32.cont [3/16] %v692, 128
        %1098 = vxpose.xlu0.b32.cont [4/16] %v698, 128
        %1099 = vxpose.xlu0.b32.cont [5/16] %v704, 128
        %1100 = vxpose.xlu0.b32.cont [6/16] %v710, 128
        %1101 = vxpose.xlu0.b32.cont [7/16] %v716, 128
        %1102 = vxpose.xlu0.b32.cont [8/16] %v722, 128
        %1103 = vxpose.xlu0.b32.cont [9/16] 0.0, 128
        %1104 = vxpose.xlu0.b32.cont [10/16] 0.0, 128
        %1105 = vxpose.xlu0.b32.cont [11/16] 0.0, 128
        %1106 = vxpose.xlu0.b32.cont [12/16] 0.0, 128
        %1107 = vxpose.xlu0.b32.cont [13/16] 0.0, 128
        %1108 = vxpose.xlu0.b32.cont [14/16] 0.0, 128
        %1109 = vxpose.xlu0.b32.cont [15/16] 0.0, 128
        %1110 = vxpose.xlu0.b32.end [16/16] 0.0, 128
        %v1111 = vpop.trf.xlu0
        %v1112 = vpop.trf.xlu0
        %v1113 = vpop.trf.xlu0
        %v1114 = vpop.trf.xlu0
        %v1115 = vpop.trf.xlu0
        %v1116 = vpop.trf.xlu0
        %v1117 = vpop.trf.xlu0
        %v1118 = vpop.trf.xlu0
        %v1119 = vpop.trf.xlu0
        %v1120 = vpop.trf.xlu0
        %v1121 = vpop.trf.xlu0
        %v1122 = vpop.trf.xlu0
        %v1123 = vpop.trf.xlu0
        %v1124 = vpop.trf.xlu0
        %v1125 = vpop.trf.xlu0
        %v1126 = vpop.trf.xlu0
        %1127 = vst.msk [vmem:[%s492] sm:$0xff] %vm939, %v1079
        %1128 = vst.msk [vmem:[%s492 + $0x8] sm:$0xff] %vm939, %v1080
        %1129 = vst.msk [vmem:[%s492 + $0x10] sm:$0xff] %vm939, %v1081
        %1130 = vst.msk [vmem:[%s492 + $0x18] sm:$0xff] %vm939, %v1082
        %1131 = vst.msk [vmem:[%s492 + $0x20] sm:$0xff] %vm939, %v1083
        %1132 = vst.msk [vmem:[%s492 + $0x28] sm:$0xff] %vm939, %v1084
        %1133 = vst.msk [vmem:[%s492 + $0x30] sm:$0xff] %vm939, %v1085
        %1134 = vst.msk [vmem:[%s492 + $0x38] sm:$0xff] %vm939, %v1086
        %1135 = vst.msk [vmem:[%s492 + $0x40] sm:$0xff] %vm939, %v1087
        %1136 = vst.msk [vmem:[%s492 + $0x48] sm:$0xff] %vm939, %v1088
        %1137 = vst.msk [vmem:[%s492 + $0x50] sm:$0xff] %vm939, %v1089
        %1138 = vst.msk [vmem:[%s492 + $0x58] sm:$0xff] %vm939, %v1090
        %1139 = vst.msk [vmem:[%s492 + $0x60] sm:$0xff] %vm939, %v1091
        %1140 = vst.msk [vmem:[%s492 + $0x68] sm:$0xff] %vm939, %v1092
        %1141 = vst.msk [vmem:[%s492 + $0x70] sm:$0xff] %vm939, %v1093
        %1142 = vst.msk [vmem:[%s492 + $0x78] sm:$0xff] %vm939, %v1094
        %1143 = vst.msk [vmem:[%s492 + $0x80] sm:$0xff] %vm939, %v1111
        %1144 = vst.msk [vmem:[%s492 + $0x88] sm:$0xff] %vm939, %v1112
        %1145 = vst.msk [vmem:[%s492 + $0x90] sm:$0xff] %vm939, %v1113
        %1146 = vst.msk [vmem:[%s492 + $0x98] sm:$0xff] %vm939, %v1114
        %1147 = vst.msk [vmem:[%s492 + $0xa0] sm:$0xff] %vm939, %v1115
        %1148 = vst.msk [vmem:[%s492 + $0xa8] sm:$0xff] %vm939, %v1116
        %1149 = vst.msk [vmem:[%s492 + $0xb0] sm:$0xff] %vm939, %v1117
        %1150 = vst.msk [vmem:[%s492 + $0xb8] sm:$0xff] %vm939, %v1118
        %1151 = vst.msk [vmem:[%s492 + $0xc0] sm:$0xff] %vm939, %v1119
        %1152 = vst.msk [vmem:[%s492 + $0xc8] sm:$0xff] %vm939, %v1120
        %1153 = vst.msk [vmem:[%s492 + $0xd0] sm:$0xff] %vm939, %v1121
        %1154 = vst.msk [vmem:[%s492 + $0xd8] sm:$0xff] %vm939, %v1122
        %1155 = vst.msk [vmem:[%s492 + $0xe0] sm:$0xff] %vm939, %v1123
        %1156 = vst.msk [vmem:[%s492 + $0xe8] sm:$0xff] %vm939, %v1124
        %1157 = vst.msk [vmem:[%s492 + $0xf0] sm:$0xff] %vm939, %v1125
        %1158 = vst.msk [vmem:[%s492 + $0xf8] sm:$0xff] %vm939, %v1126
        %1159 = vxpose.xlu0.b32.start [1/16] %v807, 128
        %1160 = vxpose.xlu0.b32.cont [2/16] 0.0, 128
        %1161 = vxpose.xlu0.b32.cont [3/16] 0.0, 128
        %1162 = vxpose.xlu0.b32.cont [4/16] 0.0, 128
        %1163 = vxpose.xlu0.b32.cont [5/16] 0.0, 128
        %1164 = vxpose.xlu0.b32.cont [6/16] 0.0, 128
        %1165 = vxpose.xlu0.b32.cont [7/16] 0.0, 128
        %1166 = vxpose.xlu0.b32.cont [8/16] 0.0, 128
        %1167 = vxpose.xlu0.b32.cont [9/16] 0.0, 128
        %1168 = vxpose.xlu0.b32.cont [10/16] 0.0, 128
        %1169 = vxpose.xlu0.b32.cont [11/16] 0.0, 128
        %1170 = vxpose.xlu0.b32.cont [12/16] 0.0, 128
        %1171 = vxpose.xlu0.b32.cont [13/16] 0.0, 128
        %1172 = vxpose.xlu0.b32.cont [14/16] 0.0, 128
        %1173 = vxpose.xlu0.b32.cont [15/16] 0.0, 128
        %1174 = vxpose.xlu0.b32.end [16/16] 0.0, 128
        %v1175 = vpop.trf.xlu0
        %v1176 = vpop.trf.xlu0
        %v1177 = vpop.trf.xlu0
        %v1178 = vpop.trf.xlu0
        %v1179 = vpop.trf.xlu0
        %v1180 = vpop.trf.xlu0
        %v1181 = vpop.trf.xlu0
        %v1182 = vpop.trf.xlu0
        %v1183 = vpop.trf.xlu0
        %v1184 = vpop.trf.xlu0
        %v1185 = vpop.trf.xlu0
        %v1186 = vpop.trf.xlu0
        %v1187 = vpop.trf.xlu0
        %v1188 = vpop.trf.xlu0
        %v1189 = vpop.trf.xlu0
        %v1190 = vpop.trf.xlu0
        %1191 = vxpose.xlu0.b32.start [1/16] %v809, 128
        %1192 = vxpose.xlu0.b32.cont [2/16] 0.0, 128
        %1193 = vxpose.xlu0.b32.cont [3/16] 0.0, 128
        %1194 = vxpose.xlu0.b32.cont [4/16] 0.0, 128
        %1195 = vxpose.xlu0.b32.cont [5/16] 0.0, 128
        %1196 = vxpose.xlu0.b32.cont [6/16] 0.0, 128
        %1197 = vxpose.xlu0.b32.cont [7/16] 0.0, 128
        %1198 = vxpose.xlu0.b32.cont [8/16] 0.0, 128
        %1199 = vxpose.xlu0.b32.cont [9/16] 0.0, 128
        %1200 = vxpose.xlu0.b32.cont [10/16] 0.0, 128
        %1201 = vxpose.xlu0.b32.cont [11/16] 0.0, 128
        %1202 = vxpose.xlu0.b32.cont [12/16] 0.0, 128
        %1203 = vxpose.xlu0.b32.cont [13/16] 0.0, 128
        %1204 = vxpose.xlu0.b32.cont [14/16] 0.0, 128
        %1205 = vxpose.xlu0.b32.cont [15/16] 0.0, 128
        %1206 = vxpose.xlu0.b32.end [16/16] 0.0, 128
        %v1207 = vpop.trf.xlu0
        %v1208 = vpop.trf.xlu0
        %v1209 = vpop.trf.xlu0
        %v1210 = vpop.trf.xlu0
        %v1211 = vpop.trf.xlu0
        %v1212 = vpop.trf.xlu0
        %v1213 = vpop.trf.xlu0
        %v1214 = vpop.trf.xlu0
        %v1215 = vpop.trf.xlu0
        %v1216 = vpop.trf.xlu0
        %v1217 = vpop.trf.xlu0
        %v1218 = vpop.trf.xlu0
        %v1219 = vpop.trf.xlu0
        %v1220 = vpop.trf.xlu0
        %v1221 = vpop.trf.xlu0
        %v1222 = vpop.trf.xlu0
        %vm1223 = vcmask 64512
        %1224 = vst.msk [vmem:[%s482] sm:$0xff] %vm1223, %v1175
        %1225 = vst.msk [vmem:[%s482 + $0x8] sm:$0xff] %vm1223, %v1176
        %1226 = vst.msk [vmem:[%s482 + $0x10] sm:$0xff] %vm1223, %v1177
        %1227 = vst.msk [vmem:[%s482 + $0x18] sm:$0xff] %vm1223, %v1178
        %1228 = vst.msk [vmem:[%s482 + $0x20] sm:$0xff] %vm1223, %v1179
        %1229 = vst.msk [vmem:[%s482 + $0x28] sm:$0xff] %vm1223, %v1180
        %1230 = vst.msk [vmem:[%s482 + $0x30] sm:$0xff] %vm1223, %v1181
        %1231 = vst.msk [vmem:[%s482 + $0x38] sm:$0xff] %vm1223, %v1182
        %1232 = vst.msk [vmem:[%s482 + $0x40] sm:$0xff] %vm1223, %v1183
        %1233 = vst.msk [vmem:[%s482 + $0x48] sm:$0xff] %vm1223, %v1184
        %1234 = vst.msk [vmem:[%s482 + $0x50] sm:$0xff] %vm1223, %v1185
        %1235 = vst.msk [vmem:[%s482 + $0x58] sm:$0xff] %vm1223, %v1186
        %1236 = vst.msk [vmem:[%s482 + $0x60] sm:$0xff] %vm1223, %v1187
        %1237 = vst.msk [vmem:[%s482 + $0x68] sm:$0xff] %vm1223, %v1188
        %1238 = vst.msk [vmem:[%s482 + $0x70] sm:$0xff] %vm1223, %v1189
        %1239 = vst.msk [vmem:[%s482 + $0x78] sm:$0xff] %vm1223, %v1190
        %1240 = vst.msk [vmem:[%s482 + $0x80] sm:$0xff] %vm1223, %v1207
        %1241 = vst.msk [vmem:[%s482 + $0x88] sm:$0xff] %vm1223, %v1208
        %1242 = vst.msk [vmem:[%s482 + $0x90] sm:$0xff] %vm1223, %v1209
        %1243 = vst.msk [vmem:[%s482 + $0x98] sm:$0xff] %vm1223, %v1210
        %1244 = vst.msk [vmem:[%s482 + $0xa0] sm:$0xff] %vm1223, %v1211
        %1245 = vst.msk [vmem:[%s482 + $0xa8] sm:$0xff] %vm1223, %v1212
        %1246 = vst.msk [vmem:[%s482 + $0xb0] sm:$0xff] %vm1223, %v1213
        %1247 = vst.msk [vmem:[%s482 + $0xb8] sm:$0xff] %vm1223, %v1214
        %1248 = vst.msk [vmem:[%s482 + $0xc0] sm:$0xff] %vm1223, %v1215
        %1249 = vst.msk [vmem:[%s482 + $0xc8] sm:$0xff] %vm1223, %v1216
        %1250 = vst.msk [vmem:[%s482 + $0xd0] sm:$0xff] %vm1223, %v1217
        %1251 = vst.msk [vmem:[%s482 + $0xd8] sm:$0xff] %vm1223, %v1218
        %1252 = vst.msk [vmem:[%s482 + $0xe0] sm:$0xff] %vm1223, %v1219
        %1253 = vst.msk [vmem:[%s482 + $0xe8] sm:$0xff] %vm1223, %v1220
        %1254 = vst.msk [vmem:[%s482 + $0xf0] sm:$0xff] %vm1223, %v1221
        %1255 = vst.msk [vmem:[%s482 + $0xf8] sm:$0xff] %vm1223, %v1222
        %vm1256 = vcmask 1043456
        %v1257 = vsel %vm1256, %v1061, 0.0
        %v1258 = vsel %vm1256, %v1062, 0.0
        %1259 = vxpose.xlu0.b32.start [1/16] %v1257, 128
        %1260 = vxpose.xlu0.b32.cont [2/16] 0.0, 128
        %1261 = vxpose.xlu0.b32.cont [3/16] 0.0, 128
        %1262 = vxpose.xlu0.b32.cont [4/16] 0.0, 128
        %1263 = vxpose.xlu0.b32.cont [5/16] 0.0, 128
        %1264 = vxpose.xlu0.b32.cont [6/16] 0.0, 128
        %1265 = vxpose.xlu0.b32.cont [7/16] 0.0, 128
        %1266 = vxpose.xlu0.b32.cont [8/16] 0.0, 128
        %1267 = vxpose.xlu0.b32.cont [9/16] 0.0, 128
        %1268 = vxpose.xlu0.b32.cont [10/16] 0.0, 128
        %1269 = vxpose.xlu0.b32.cont [11/16] 0.0, 128
        %1270 = vxpose.xlu0.b32.cont [12/16] 0.0, 128
        %1271 = vxpose.xlu0.b32.cont [13/16] 0.0, 128
        %1272 = vxpose.xlu0.b32.cont [14/16] 0.0, 128
        %1273 = vxpose.xlu0.b32.cont [15/16] 0.0, 128
        %1274 = vxpose.xlu0.b32.end [16/16] 0.0, 128
        %v1275 = vpop.trf.xlu0
        %v1276 = vpop.trf.xlu0
        %v1277 = vpop.trf.xlu0
        %v1278 = vpop.trf.xlu0
        %v1279 = vpop.trf.xlu0
        %v1280 = vpop.trf.xlu0
        %v1281 = vpop.trf.xlu0
        %v1282 = vpop.trf.xlu0
        %v1283 = vpop.trf.xlu0
        %v1284 = vpop.trf.xlu0
        %v1285 = vpop.trf.xlu0
        %v1286 = vpop.trf.xlu0
        %v1287 = vpop.trf.xlu0
        %v1288 = vpop.trf.xlu0
        %v1289 = vpop.trf.xlu0
        %v1290 = vpop.trf.xlu0
        %1291 = vxpose.xlu0.b32.start [1/16] %v1258, 128
        %1292 = vxpose.xlu0.b32.cont [2/16] 0.0, 128
        %1293 = vxpose.xlu0.b32.cont [3/16] 0.0, 128
        %1294 = vxpose.xlu0.b32.cont [4/16] 0.0, 128
        %1295 = vxpose.xlu0.b32.cont [5/16] 0.0, 128
        %1296 = vxpose.xlu0.b32.cont [6/16] 0.0, 128
        %1297 = vxpose.xlu0.b32.cont [7/16] 0.0, 128
        %1298 = vxpose.xlu0.b32.cont [8/16] 0.0, 128
        %1299 = vxpose.xlu0.b32.cont [9/16] 0.0, 128
        %1300 = vxpose.xlu0.b32.cont [10/16] 0.0, 128
        %1301 = vxpose.xlu0.b32.cont [11/16] 0.0, 128
        %1302 = vxpose.xlu0.b32.cont [12/16] 0.0, 128
        %1303 = vxpose.xlu0.b32.cont [13/16] 0.0, 128
        %1304 = vxpose.xlu0.b32.cont [14/16] 0.0, 128
        %1305 = vxpose.xlu0.b32.cont [15/16] 0.0, 128
        %1306 = vxpose.xlu0.b32.end [16/16] 0.0, 128
        %v1307 = vpop.trf.xlu0
        %v1308 = vpop.trf.xlu0
        %v1309 = vpop.trf.xlu0
        %v1310 = vpop.trf.xlu0
        %v1311 = vpop.trf.xlu0
        %v1312 = vpop.trf.xlu0
        %v1313 = vpop.trf.xlu0
        %v1314 = vpop.trf.xlu0
        %v1315 = vpop.trf.xlu0
        %v1316 = vpop.trf.xlu0
        %v1317 = vpop.trf.xlu0
        %v1318 = vpop.trf.xlu0
        %v1319 = vpop.trf.xlu0
        %v1320 = vpop.trf.xlu0
        %v1321 = vpop.trf.xlu0
        %v1322 = vpop.trf.xlu0
        %vm1323 = vcmask 31744
        %1324 = vst.msk [vmem:[%s502] sm:$0xff] %vm1323, %v1275
        %1325 = vst.msk [vmem:[%s502 + $0x8] sm:$0xff] %vm1323, %v1276
        %1326 = vst.msk [vmem:[%s502 + $0x10] sm:$0xff] %vm1323, %v1277
        %1327 = vst.msk [vmem:[%s502 + $0x18] sm:$0xff] %vm1323, %v1278
        %1328 = vst.msk [vmem:[%s502 + $0x20] sm:$0xff] %vm1323, %v1279
        %1329 = vst.msk [vmem:[%s502 + $0x28] sm:$0xff] %vm1323, %v1280
        %1330 = vst.msk [vmem:[%s502 + $0x30] sm:$0xff] %vm1323, %v1281
        %1331 = vst.msk [vmem:[%s502 + $0x38] sm:$0xff] %vm1323, %v1282
        %1332 = vst.msk [vmem:[%s502 + $0x40] sm:$0xff] %vm1323, %v1283
        %1333 = vst.msk [vmem:[%s502 + $0x48] sm:$0xff] %vm1323, %v1284
        %1334 = vst.msk [vmem:[%s502 + $0x50] sm:$0xff] %vm1323, %v1285
        %1335 = vst.msk [vmem:[%s502 + $0x58] sm:$0xff] %vm1323, %v1286
        %1336 = vst.msk [vmem:[%s502 + $0x60] sm:$0xff] %vm1323, %v1287
        %1337 = vst.msk [vmem:[%s502 + $0x68] sm:$0xff] %vm1323, %v1288
        %1338 = vst.msk [vmem:[%s502 + $0x70] sm:$0xff] %vm1323, %v1289
        %1339 = vst.msk [vmem:[%s502 + $0x78] sm:$0xff] %vm1323, %v1290
        %1340 = vst.msk [vmem:[%s502 + $0x80] sm:$0xff] %vm1323, %v1307
        %1341 = vst.msk [vmem:[%s502 + $0x88] sm:$0xff] %vm1323, %v1308
        %1342 = vst.msk [vmem:[%s502 + $0x90] sm:$0xff] %vm1323, %v1309
        %1343 = vst.msk [vmem:[%s502 + $0x98] sm:$0xff] %vm1323, %v1310
        %1344 = vst.msk [vmem:[%s502 + $0xa0] sm:$0xff] %vm1323, %v1311
        %1345 = vst.msk [vmem:[%s502 + $0xa8] sm:$0xff] %vm1323, %v1312
        %1346 = vst.msk [vmem:[%s502 + $0xb0] sm:$0xff] %vm1323, %v1313
        %1347 = vst.msk [vmem:[%s502 + $0xb8] sm:$0xff] %vm1323, %v1314
        %1348 = vst.msk [vmem:[%s502 + $0xc0] sm:$0xff] %vm1323, %v1315
        %1349 = vst.msk [vmem:[%s502 + $0xc8] sm:$0xff] %vm1323, %v1316
        %1350 = vst.msk [vmem:[%s502 + $0xd0] sm:$0xff] %vm1323, %v1317
        %1351 = vst.msk [vmem:[%s502 + $0xd8] sm:$0xff] %vm1323, %v1318
        %1352 = vst.msk [vmem:[%s502 + $0xe0] sm:$0xff] %vm1323, %v1319
        %1353 = vst.msk [vmem:[%s502 + $0xe8] sm:$0xff] %vm1323, %v1320
        %1354 = vst.msk [vmem:[%s502 + $0xf0] sm:$0xff] %vm1323, %v1321
        %1355 = vst.msk [vmem:[%s502 + $0xf8] sm:$0xff] %vm1323, %v1322
        %s1356 = sand.u32 %s211, 1
        %s1357 = scalar_lea.sflag [#allocation4], %s1356
        %s1358 = sand.u32 %s211, 1
        %s1359 = smul.addr %s1358, 2
        %s1360 = scalar_lea.vmem [#allocation5], %s1359
        %s1361 = smul.u32 32, %s33
        %p1362 = scmp.lt.s32.totalorder %s32, 1
        %s1363 = scalar_select %p1362, %s32, 1
        %p1364 = scmp.lt.s32.totalorder %s1361, 31
        %s1365 = scalar_select %p1364, %s1361, 31
        %s1366 = smul.addr %s1363, 32
        %s1367 = sadd.s32 %s1365, %s1366
        %s1368 = smul.addr %s1367, 8
        %s1369 = scalar_lea.vmem %s8, %s1368
        %s1370 = smul.u32 32, %s33
        %p1371 = scmp.lt.s32.totalorder %s32, 1
        %s1372 = scalar_select %p1371, %s32, 1
        %p1373 = scmp.lt.s32.totalorder %s1370, 31
        %s1374 = scalar_select %p1373, %s1370, 31
        %s1375 = smul.addr %s1372, 32
        %s1376 = sadd.s32 %s1374, %s1375
        %s1377 = smul.addr %s1376, 8
        %s1378 = scalar_lea.vmem %s9, %s1377
        %s1379 = smul.u32 32, %s33
        %p1380 = scmp.lt.s32.totalorder %s32, 1
        %s1381 = scalar_select %p1380, %s32, 1
        %p1382 = scmp.lt.s32.totalorder %s1379, 31
        %s1383 = scalar_select %p1382, %s1379, 31
        %s1384 = smul.addr %s1381, 32
        %s1385 = sadd.s32 %s1383, %s1384
        %s1386 = smul.addr %s1385, 8
        %s1387 = scalar_lea.vmem %s10, %s1386
        // Predicated region
        $region53: #{tpu_custom_call.1} parent=47 // pred_check
          %p1388 = pneg %p221
        $region54: #{tpu_custom_call.1} parent=47 // pred_check_branch
          %1390 = sbr.rel (%p1388) target = $region56
        $region55: #{tpu_custom_call.1} parent=47 // pred_region
          %s1391 = smul.u32 2, %s33
          %s1393 = ssub.s32 32, 32
          %1394 = vsyncadd %s1357, %s1393
          %s1395 = smul.addr %s32, 2
          %s1396 = sadd.s32 %s1391, %s1395
          %s1397 = smul.addr %s1396, 16
          %s1398 = scalar_lea.hbm %s7, %s1397
          %s1400 = sshll.u32 %s1360, 4
          %s1401 = int_to_ptr.vmem [resolvable:$true] %s1400
          %1403 = dma.vmem_to_hbm [thread:$0]  %s1401, 32, %s1398, %s1357
        $region56: #{tpu_custom_call.1} parent=47 // pred_fallthru
          _
        // Predicated region
        $region57: #{tpu_custom_call.1} parent=47 // pred_check
          %p1404 = pneg %p249
        $region58: #{tpu_custom_call.1} parent=47 // pred_check_branch
          %1406 = sbr.rel (%p1404) target = $region60
        $region59: #{tpu_custom_call.1} parent=47 // pred_region
          %s1407 = smul.u32 32, %s33
        $region60: #{tpu_custom_call.1} parent=47 // pred_fallthru
          _
        // Predicated region
        $region61: #{tpu_custom_call.1} parent=47 // pred_check
          %p1408 = pneg %p277
        $region62: #{tpu_custom_call.1} parent=47 // pred_check_branch
          %1410 = sbr.rel (%p1408) target = $region64
        $region63: #{tpu_custom_call.1} parent=47 // pred_region
          %s1411 = smul.u32 32, %s33
        $region64: #{tpu_custom_call.1} parent=47 // pred_fallthru
          _
        // Predicated region
        $region65: #{tpu_custom_call.1} parent=47 // pred_check
          %p1412 = pneg %p305
        $region66: #{tpu_custom_call.1} parent=47 // pred_check_branch
          %1414 = sbr.rel (%p1412) target = $region68
        $region67: #{tpu_custom_call.1} parent=47 // pred_region
          %s1415 = smul.u32 32, %s33
        $region68: #{tpu_custom_call.1} parent=47 // pred_fallthru
          _
      $region48: #{tpu_custom_call.1} parent=5 // pred_fallthru
        _
      %p1416 = scmp.le.s32.totalorder 2, %s23
      // Predicated region
      $region69: #{tpu_custom_call.1} parent=5 // pred_check
        %p1417 = pneg %p1416
      $region70: #{tpu_custom_call.1} parent=5 // pred_check_branch
        %1419 = sbr.rel (%p1417) target = $region72
      $region71: #{tpu_custom_call.1} parent=5 // pred_region
        %s1420 = ssub.s32 %s23, 2
        // Predicated region
        $region73: #{tpu_custom_call.1} parent=71 // pred_check
          %p1421 = pneg %p227
        $region74: #{tpu_custom_call.1} parent=71 // pred_check_branch
          %1423 = sbr.rel (%p1421) target = $region76
        $region75: #{tpu_custom_call.1} parent=71 // pred_region
          %s1424 = sand.u32 %s212, 1
          %s1425 = scalar_lea.sflag [#allocation4], %s1424
          %s1426 = sand.u32 %s212, 1
          %s1427 = smul.addr %s1426, 2
          %s1428 = scalar_lea.vmem [#allocation5], %s1427
          %1429 = dma.done %s1425, 32
        $region76: #{tpu_custom_call.1} parent=71 // pred_fallthru
          _
        // Predicated region
        $region77: #{tpu_custom_call.1} parent=71 // pred_check
          %p1430 = pneg %p255
        $region78: #{tpu_custom_call.1} parent=71 // pred_check_branch
          %1432 = sbr.rel (%p1430) target = $region80
        $region79: #{tpu_custom_call.1} parent=71 // pred_region
          %s1433 = smul.u32 32, %s35
          %p1434 = scmp.lt.s32.totalorder %s34, 1
          %s1435 = scalar_select %p1434, %s34, 1
          %p1436 = scmp.lt.s32.totalorder %s1433, 31
          %s1437 = scalar_select %p1436, %s1433, 31
          %s1438 = smul.addr %s1435, 32
          %s1439 = sadd.s32 %s1437, %s1438
          %s1440 = smul.addr %s1439, 8
          %s1441 = scalar_lea.vmem %s8, %s1440
        $region80: #{tpu_custom_call.1} parent=71 // pred_fallthru
          _
        // Predicated region
        $region81: #{tpu_custom_call.1} parent=71 // pred_check
          %p1442 = pneg %p283
        $region82: #{tpu_custom_call.1} parent=71 // pred_check_branch
          %1444 = sbr.rel (%p1442) target = $region84
        $region83: #{tpu_custom_call.1} parent=71 // pred_region
          %s1445 = smul.u32 32, %s35
          %p1446 = scmp.lt.s32.totalorder %s34, 1
          %s1447 = scalar_select %p1446, %s34, 1
          %p1448 = scmp.lt.s32.totalorder %s1445, 31
          %s1449 = scalar_select %p1448, %s1445, 31
          %s1450 = smul.addr %s1447, 32
          %s1451 = sadd.s32 %s1449, %s1450
          %s1452 = smul.addr %s1451, 8
          %s1453 = scalar_lea.vmem %s9, %s1452
        $region84: #{tpu_custom_call.1} parent=71 // pred_fallthru
          _
        // Predicated region
        $region85: #{tpu_custom_call.1} parent=71 // pred_check
          %p1454 = pneg %p311
        $region86: #{tpu_custom_call.1} parent=71 // pred_check_branch
          %1456 = sbr.rel (%p1454) target = $region88
        $region87: #{tpu_custom_call.1} parent=71 // pred_region
          %s1457 = smul.u32 32, %s35
          %p1458 = scmp.lt.s32.totalorder %s34, 1
          %s1459 = scalar_select %p1458, %s34, 1
          %p1460 = scmp.lt.s32.totalorder %s1457, 31
          %s1461 = scalar_select %p1460, %s1457, 31
          %s1462 = smul.addr %s1459, 32
          %s1463 = sadd.s32 %s1461, %s1462
          %s1464 = smul.addr %s1463, 8
          %s1465 = scalar_lea.vmem %s10, %s1464
        $region88: #{tpu_custom_call.1} parent=71 // pred_fallthru
          _
      $region72: #{tpu_custom_call.1} parent=5 // pred_fallthru
        _
    $region6: #{tpu_custom_call.1} parent=1 // loop_footer
      %s27 = sadd.s32 1, %s23
    $region7: #{tpu_custom_call.1} parent=1 // loop_footer_branch
      %22 = sbr.rel target = $region3
    $region8: #{tpu_custom_call.1} parent=1 // loop_exit
      _
    %1466 = vsyncpa [#allocation3], 1
    %s1467 = scalar_lea.sflag [#allocation3], 1
    %1468 = vsyncpa %s1467, 1
    %1469 = vsyncpa [#allocation4], 1
    %s1470 = scalar_lea.sflag [#allocation4], 1
    %1471 = vsyncpa %s1470, 1

</llo_original>
